<compile_context>
chip_gen: v5e
topology: v5e:2x2
jax: 0.10.0
libtpu: 0.0.40
codegen_flags: <defaults>
</compile_context>

<pallas_src>
import functools

import jax
import jax.numpy as jnp
from jax.experimental import pallas as pl
from jax.experimental.pallas import tpu as pltpu

NEG_SLOPE = 0.2
_BN_EPS = 1e-5
_VMEM_LIMIT = 40 * 1024 * 1024   # comfortable on v5e/v6e (128 MiB) and v7x (64 MiB)


def _round_up(x, m):
    return ((x + m - 1) // m) * m


def _num_tensorcores_per_chip():
    try:
        kind = jax.devices()[0].device_kind.lower()
    except Exception:
        return 1
    return 2 if ("v7" in kind or "7x" in kind) else 1


# ----------------------------------------------------------------------------
# Conv "tap-sum" kernel.  One grid step per image: the whole flattened, padded
# activation lives in a single VMEM block; each 3x3 tap is a static
# (row_offset, channel_offset) slice of that block matmul'd with its
# (tap_k, Cout) weight and accumulated in f32.  Epilogue = folded-BN shift +
# LeakyReLU, stored as bf16.
# ----------------------------------------------------------------------------
def _conv_tap_kernel(x_ref, w_ref, b_ref, o_ref, *, taps, tap_k, neg_slope):
    tm = o_ref.shape[1]
    cout = o_ref.shape[2]
    acc = jnp.zeros((tm, cout), jnp.float32)
    for t, (roff, coff) in enumerate(taps):     # static, fully unrolled (<= 9)
        xt = x_ref[0, roff:roff + tm, coff:coff + tap_k]
        acc = acc + jnp.dot(xt, w_ref[t], preferred_element_type=jnp.float32)
    y = acc + b_ref[...]                         # (1, Cout) broadcast, f32
    y = jnp.where(y > 0, y, jnp.float32(neg_slope) * y)
    o_ref[0] = y.astype(o_ref.dtype)


def _conv_tap_matmul(xf, wt, shift, taps, tap_k, l_out):
    """xf: (N, L, K) bf16 flattened padded activation; wt: (T, tap_k, Cout)
    bf16 tap weights; shift: (Cout,) f32.  One grid step per image."""
    N, L, K = xf.shape
    T, _, Cout = wt.shape

    max_roff = max(r for r, _ in taps)
    tm_out = _round_up(l_out, 8)                 # output rows (flat)
    tm_in = _round_up(tm_out + max_roff, 8)      # input rows incl. tap halo
    pad_rows = tm_in - L
    if pad_rows > 0:
        xf = jnp.pad(xf, ((0, 0), (0, pad_rows), (0, 0)))
    b2 = shift.reshape(1, Cout).astype(jnp.float32)

    kernel = functools.partial(_conv_tap_kernel, taps=tuple(taps),
                               tap_k=tap_k, neg_slope=NEG_SLOPE)
    out = pl.pallas_call(
        kernel,
        out_shape=jax.ShapeDtypeStruct((N, tm_out, Cout), jnp.bfloat16),
        grid_spec=pltpu.PrefetchScalarGridSpec(
            num_scalar_prefetch=0,
            grid=(N,),
            in_specs=[
                pl.BlockSpec((1, tm_in, K), lambda n: (n, 0, 0)),       # x
                pl.BlockSpec((T, tap_k, Cout), lambda n: (0, 0, 0)),    # taps
                pl.BlockSpec((1, Cout), lambda n: (0, 0)),              # shift
            ],
            out_specs=pl.BlockSpec((1, tm_out, Cout), lambda n: (n, 0, 0)),
        ),
        compiler_params=pltpu.CompilerParams(
            dimension_semantics=("parallel",),
            vmem_limit_bytes=_VMEM_LIMIT,
        ),
    )(xf, wt, b2)
    return out


def conv3x3(x, w, bias, stride, use_bn):
    """x: (N,H,W,Cin) bf16, w: (3,3,Cin,Cout) f32, bias: (Cout,) f32.
    3x3 conv (pad=1) + folded eval-mode BN + LeakyReLU(0.2)."""
    N, H, W, Cin = x.shape
    Cout = w.shape[-1]
    assert stride in (1, 2) and H % 2 == 0 and W % 2 == 0

    if use_bn:
        # fresh BN, eval mode: gamma=1, beta=0, mean=0, var=1
        s = float(1.0 / (1.0 + _BN_EPS) ** 0.5)
        w = w * s
        shift = bias * s
    else:
        shift = bias

    xp = jnp.pad(x, ((0, 0), (1, 1), (1, 1), (0, 0)))     # (N, H+2, W+2, Cin)
    Ho, Wo = H // stride, W // stride

    if stride == 1 and Cin * 9 <= 32:
        # conv1 (Cin=3): wrapper im2col -> single K=27 matmul (no tap loop).
        patches = jnp.concatenate(
            [xp[:, dh:dh + H, dw:dw + W, :] for dh in range(3) for dw in range(3)],
            axis=-1)                                       # (N, H, W, 9*Cin)
        xf = patches.reshape(N, H * W, 9 * Cin)
        taps = ((0, 0),)
        tap_k = 9 * Cin
        wt = w.reshape(1, 9 * Cin, Cout)
        out = _conv_tap_matmul(xf.astype(jnp.bfloat16), wt.astype(jnp.bfloat16),
                               shift, taps, tap_k, H * W)
        return out[:, :H * W, :].reshape(N, H, W, Cout)

    if stride == 1:
        Wq = W + 2
        xf = xp.reshape(N, (H + 2) * Wq, Cin)
        taps = tuple((dh * Wq + dw, 0) for dh in range(3) for dw in range(3))
        tap_k = Cin
        wt = w.reshape(9, Cin, Cout)
    else:
        # 4 spatial phases stacked on channels -> stride-1 conv over phases.
        Hq, Wq = Ho + 1, Wo + 1
        x4 = xp.reshape(N, Hq, 2, Wq, 2, Cin).transpose(0, 1, 3, 2, 4, 5)
        xf = x4.reshape(N, Hq * Wq, 4 * Cin)
        if Cin % 128 == 0:
            # 9 taps of K=Cin at 128-aligned channel offsets: no zero padding.
            taps = tuple(((dh // 2) * Wq + (dw // 2),
                          ((dh % 2) * 2 + (dw % 2)) * Cin)
                         for dh in range(3) for dw in range(3))
            tap_k = Cin
            wt = jnp.stack([w[dh, dw] for dh in range(3) for dw in range(3)],
                           axis=0)                          # (9, Cin, Cout)
        else:
            # small Cin (64): 4 taps of K=4*Cin (a few zero-padded slots).
            taps = tuple((a * Wq + b, 0) for a in range(2) for b in range(2))
            tap_k = 4 * Cin
            taps_w = []
            for a in range(2):
                for b in range(2):
                    kb = []
                    for p in range(2):
                        for q in range(2):
                            dh, dw = 2 * a + p, 2 * b + q
                            kb.append(w[dh, dw] if (dh < 3 and dw < 3)
                                      else jnp.zeros((Cin, Cout), w.dtype))
                    taps_w.append(jnp.concatenate(kb, axis=0))
            wt = jnp.stack(taps_w, axis=0)                  # (4, 4*Cin, Cout)

    l_out = Ho * Wq
    out = _conv_tap_matmul(xf.astype(jnp.bfloat16), wt.astype(jnp.bfloat16),
                           shift, taps, tap_k, l_out)
    # TODO(synk): the trailing garbage columns could be masked in-kernel to
    #             keep the Wq-wide layout between layers and skip this slice.
    return out[:, :l_out, :].reshape(N, Ho, Wq, Cout)[:, :, :Wo, :]


# ----------------------------------------------------------------------------
# Fused dense kernel for fc1:  out = lrelu( X @ W + b ), bf16 MXU, f32 acc.
# ----------------------------------------------------------------------------
def _fc_kernel(x_ref, w_ref, b_ref, o_ref, acc_ref, *, neg_slope):
    k = pl.program_id(2)

    @pl.when(k == 0)
    def _():
        acc_ref[...] = jnp.zeros_like(acc_ref)

    acc_ref[...] += jnp.dot(x_ref[...], w_ref[...],
                            preferred_element_type=jnp.float32)

    @pl.when(k == pl.num_programs(2) - 1)
    def _():
        y = acc_ref[...] + b_ref[...]
        y = jnp.where(y > 0, y, jnp.float32(neg_slope) * y)
        o_ref[...] = y.astype(o_ref.dtype)


def dense_lrelu(x, w, b):
    M, K = x.shape
    Kw, Nf = w.shape
    assert K == Kw

    tm = _round_up(M, 8)

    tk = K
    for cand in (3072, 2304, 2048, 1536, 1024, 512, 256, 128):
        if K % cand == 0:
            tk = cand
            break

    tn = Nf
    if _num_tensorcores_per_chip() >= 2 and Nf % 256 == 0:
        tn = Nf // 2       # two N blocks -> both v7x TensorCores stream weights
    # keep double-buffered weight tile comfortably sized
    while tk * tn * 2 * 2 > 16 * 1024 * 1024 and tn % 2 == 0 and (tn // 2) % 128 == 0:
        tn //= 2

    xp = jnp.pad(x, ((0, tm - M), (0, 0))).astype(jnp.bfloat16)
    wb = w.astype(jnp.bfloat16)
    b2 = b.reshape(1, Nf).astype(jnp.float32)
    grid = (1, Nf // tn, K // tk)

    out = pl.pallas_call(
        functools.partial(_fc_kernel, neg_slope=NEG_SLOPE),
        out_shape=jax.ShapeDtypeStruct((tm, Nf), jnp.float32),
        grid_spec=pltpu.PrefetchScalarGridSpec(
            num_scalar_prefetch=0,
            grid=grid,
            in_specs=[
                pl.BlockSpec((tm, tk), lambda i, j, k: (i, k)),
                pl.BlockSpec((tk, tn), lambda i, j, k: (k, j)),
                pl.BlockSpec((1, tn), lambda i, j, k: (0, j)),
            ],
            out_specs=pl.BlockSpec((tm, tn), lambda i, j, k: (i, j)),
            scratch_shapes=[pltpu.VMEM((tm, tn), jnp.float32)],
        ),
        compiler_params=pltpu.CompilerParams(
            dimension_semantics=("parallel", "parallel", "arbitrary"),
            vmem_limit_bytes=_VMEM_LIMIT,
        ),
    )(xp, wb, b2)
    return out[:M]


# ----------------------------------------------------------------------------
# Parameters (deterministic) and full forward
# ----------------------------------------------------------------------------
_CONV_CFG = [
    # (cin, cout, stride, use_bn)
    (3, 64, 1, False),     # conv1 + lrelu1
    (64, 64, 2, True),     # conv_block1
    (64, 128, 1, True),    # conv_block2
    (128, 128, 2, True),   # conv_block3
    (128, 256, 1, True),   # conv_block4
    (256, 256, 2, True),   # conv_block5
    (256, 512, 1, True),   # conv_block6
    (512, 512, 2, True),   # conv_block7
]


def init_params(key):
    params = {"convs": []}
    for (cin, cout, stride, use_bn) in _CONV_CFG:
        key, k1, k2 = jax.random.split(key, 3)
        fan_in = 9 * cin
        w = jax.random.normal(k1, (3, 3, cin, cout), jnp.float32) / jnp.sqrt(fan_in)
        b = jax.random.normal(k2, (cout,), jnp.float32) * 0.01
        params["convs"].append((w, b, stride, use_bn))

    key, k1, k2, k3, k4 = jax.random.split(key, 5)
    fin = 512 * 6 * 6
    params["fc1_w"] = jax.random.normal(k1, (fin, 1024), jnp.float32) / jnp.sqrt(fin)
    params["fc1_b"] = jax.random.normal(k2, (1024,), jnp.float32) * 0.01
    params["fc2_w"] = jax.random.normal(k3, (1024, 1), jnp.float32) / jnp.sqrt(1024.0)
    params["fc2_b"] = jax.random.normal(k4, (1,), jnp.float32) * 0.01
    return params


def srgan_disc_forward(params, x_nchw):
    # NCHW -> NHWC, bf16 activations
    x = jnp.transpose(x_nchw, (0, 2, 3, 1)).astype(jnp.bfloat16)

    for (w, b, stride, use_bn) in params["convs"]:
        x = conv3x3(x, w, b, stride, use_bn)

    # flatten in PyTorch NCHW order: (N, H, W, C) -> (N, C*H*W)
    N, H, W, C = x.shape
    x = jnp.transpose(x, (0, 3, 1, 2)).reshape(N, C * H * W)

    x = dense_lrelu(x, params["fc1_w"], params["fc1_b"])          # (N, 1024) f32
    logits = x @ params["fc2_w"] + params["fc2_b"]                # (N, 1)
    return jax.nn.sigmoid(logits)


# ----------------------------------------------------------------------------
# Self-check reference conv (plain XLA) for the tap-sum lowerings.
# ----------------------------------------------------------------------------
def _ref_conv(x, w, b, stride, use_bn):
    y = jax.lax.conv_general_dilated(
        x.astype(jnp.float32), w.astype(jnp.float32),
        window_strides=(stride, stride), padding=((1, 1), (1, 1)),
        dimension_numbers=("NHWC", "HWIO", "NHWC"))
    y = y + b
    if use_bn:
        y = y / jnp.sqrt(1.0 + _BN_EPS)
    return jnp.where(y > 0, y, NEG_SLOPE * y)


if __name__ == "__main__":
    key = jax.random.PRNGKey(0)
    kp, kx, kt = jax.random.split(key, 3)
    params = init_params(kp)

    # --- numerical self-checks of the conv lowerings -------------------------
    k1, k2, k3 = jax.random.split(kt, 3)

    # (a) generic stride-1 (9-tap) and stride-2 4-tap (Cin not lane-aligned)
    x_t = jax.random.normal(k1, (1, 12, 12, 16), jnp.float32)
    w_t = jax.random.normal(k2, (3, 3, 16, 32), jnp.float32) / jnp.sqrt(9 * 16)
    b_t = jax.random.normal(k3, (32,), jnp.float32) * 0.01
    for stride in (1, 2):
        got = conv3x3(x_t.astype(jnp.bfloat16), w_t, b_t, stride, True)
        got = got.astype(jnp.float32)
        want = _ref_conv(x_t, w_t, b_t, stride, True)
        assert got.shape == want.shape, (got.shape, want.shape)
        err = float(jnp.max(jnp.abs(got - want)))
        assert err < 5e-2, f"conv self-check failed (stride={stride}, err={err})"

    # (b) conv1-style im2col path (Cin=3, stride 1)
    ka, kb, kc = jax.random.split(k1, 3)
    x_t = jax.random.normal(ka, (1, 8, 8, 3), jnp.float32)
    w_t = jax.random.normal(kb, (3, 3, 3, 64), jnp.float32) / jnp.sqrt(27.0)
    b_t = jax.random.normal(kc, (64,), jnp.float32) * 0.01
    got = conv3x3(x_t.astype(jnp.bfloat16), w_t, b_t, 1, False).astype(jnp.float32)
    want = _ref_conv(x_t, w_t, b_t, 1, False)
    err = float(jnp.max(jnp.abs(got - want)))
    assert err < 5e-2, f"im2col conv self-check failed (err={err})"

    # (c) stride-2 9-tap path (Cin=128, lane-aligned channel slices)
    ka, kb, kc = jax.random.split(k2, 3)
    x_t = jax.random.normal(ka, (1, 8, 8, 128), jnp.float32)
    w_t = jax.random.normal(kb, (3, 3, 128, 32), jnp.float32) / jnp.sqrt(9 * 128)
    b_t = jax.random.normal(kc, (32,), jnp.float32) * 0.01
    got = conv3x3(x_t.astype(jnp.bfloat16), w_t, b_t, 2, True).astype(jnp.float32)
    want = _ref_conv(x_t, w_t, b_t, 2, True)
    err = float(jnp.max(jnp.abs(got - want)))
    assert err < 5e-2, f"9-tap conv self-check failed (err={err})"

    # --- full forward ---------------------------------------------------------
    # The FFN hard-codes 512*6*6 features -> 96x96 spatial input
    # (four stride-2 convs: 96 -> 48 -> 24 -> 12 -> 6). Batch = 2.
    x = jax.random.normal(kx, (2, 3, 96, 96), jnp.float32)

    fwd = jax.jit(functools.partial(srgan_disc_forward, params))
    out = jax.block_until_ready(fwd(x))

    assert out.shape == (2, 1), out.shape
    assert bool(jnp.all(jnp.isfinite(out))), "non-finite output"
    assert bool(jnp.all((out > 0.0) & (out < 1.0))), "sigmoid range violated"
    print("KERNEL_OK")
</pallas_src>

<mosaic_0001>
module attributes {stable_mosaic.version = 11 : i64} {
  func.func @_conv_tap_kernel(%arg0: i32, %arg1: memref<1x200x16xbf16, #tpu.memory_space<vmem>>, %arg2: memref<9x16x32xbf16, #tpu.memory_space<vmem>>, %arg3: memref<1x32xf32, #tpu.memory_space<vmem>>, %arg4: memref<1x168x32xbf16, #tpu.memory_space<vmem>>) attributes {dimension_semantics = [#tpu.dimension_semantics<parallel>], iteration_bounds = array<i64: 1>, scalar_prefetch = 0 : i64, scratch_operands = 0 : i64, tpu.core_type = #tpu.core_type<tc>, window_params = [{transform_indices = @transform_0, window_bounds = array<i64: 1, 200, 16>}, {pipeline_mode = #tpu.pipeline_mode<synchronous>, transform_indices = @transform_1, window_bounds = array<i64: 9, 16, 32>}, {pipeline_mode = #tpu.pipeline_mode<synchronous>, transform_indices = @transform_2, window_bounds = array<i64: 1, 32>}, {transform_indices = @transform_3, window_bounds = array<i64: 1, 168, 32>}]} {
    %cst = arith.constant 0.000000e+00 : f32
    %0 = vector.broadcast %cst : f32 to vector<168x32xf32>
    %c0 = arith.constant 0 : index
    %c0_0 = arith.constant 0 : index
    %c0_1 = arith.constant 0 : index
    %1 = vector.load %arg1[%c0, %c0_0, %c0_1] : memref<1x200x16xbf16, #tpu.memory_space<vmem>>, vector<1x168x16xbf16>
    %2 = vector.shape_cast %1 : vector<1x168x16xbf16> to vector<168x16xbf16>
    %c0_2 = arith.constant 0 : index
    %c0_3 = arith.constant 0 : index
    %c0_4 = arith.constant 0 : index
    %3 = vector.load %arg2[%c0_2, %c0_3, %c0_4] : memref<9x16x32xbf16, #tpu.memory_space<vmem>>, vector<1x16x32xbf16>
    %4 = vector.shape_cast %3 : vector<1x16x32xbf16> to vector<16x32xbf16>
    %cst_5 = arith.constant dense<0.000000e+00> : vector<168x32xf32>
    %5 = tpu.matmul %2, %4, %cst_5 {dimension_numbers = #tpu.dot_dimension_numbers<[1], [0], [0], [1], [0, 0, 1, 1], [], []>} : vector<168x16xbf16>, vector<16x32xbf16>, vector<168x32xf32> -> vector<168x32xf32>
    %6 = arith.addf %0, %5 : vector<168x32xf32>
    %c0_6 = arith.constant 0 : index
    %c1 = arith.constant 1 : index
    %c0_7 = arith.constant 0 : index
    %7 = vector.load %arg1[%c0_6, %c1, %c0_7] : memref<1x200x16xbf16, #tpu.memory_space<vmem>>, vector<1x168x16xbf16>
    %8 = vector.shape_cast %7 : vector<1x168x16xbf16> to vector<168x16xbf16>
    %c1_8 = arith.constant 1 : index
    %c0_9 = arith.constant 0 : index
    %c0_10 = arith.constant 0 : index
    %9 = vector.load %arg2[%c1_8, %c0_9, %c0_10] : memref<9x16x32xbf16, #tpu.memory_space<vmem>>, vector<1x16x32xbf16>
    %10 = vector.shape_cast %9 : vector<1x16x32xbf16> to vector<16x32xbf16>
    %cst_11 = arith.constant dense<0.000000e+00> : vector<168x32xf32>
    %11 = tpu.matmul %8, %10, %cst_11 {dimension_numbers = #tpu.dot_dimension_numbers<[1], [0], [0], [1], [0, 0, 1, 1], [], []>} : vector<168x16xbf16>, vector<16x32xbf16>, vector<168x32xf32> -> vector<168x32xf32>
    %12 = arith.addf %6, %11 : vector<168x32xf32>
    %c0_12 = arith.constant 0 : index
    %c2 = arith.constant 2 : index
    %c0_13 = arith.constant 0 : index
    %13 = vector.load %arg1[%c0_12, %c2, %c0_13] : memref<1x200x16xbf16, #tpu.memory_space<vmem>>, vector<1x168x16xbf16>
    %14 = vector.shape_cast %13 : vector<1x168x16xbf16> to vector<168x16xbf16>
    %c2_14 = arith.constant 2 : index
    %c0_15 = arith.constant 0 : index
    %c0_16 = arith.constant 0 : index
    %15 = vector.load %arg2[%c2_14, %c0_15, %c0_16] : memref<9x16x32xbf16, #tpu.memory_space<vmem>>, vector<1x16x32xbf16>
    %16 = vector.shape_cast %15 : vector<1x16x32xbf16> to vector<16x32xbf16>
    %cst_17 = arith.constant dense<0.000000e+00> : vector<168x32xf32>
    %17 = tpu.matmul %14, %16, %cst_17 {dimension_numbers = #tpu.dot_dimension_numbers<[1], [0], [0], [1], [0, 0, 1, 1], [], []>} : vector<168x16xbf16>, vector<16x32xbf16>, vector<168x32xf32> -> vector<168x32xf32>
    %18 = arith.addf %12, %17 : vector<168x32xf32>
    %c0_18 = arith.constant 0 : index
    %c14 = arith.constant 14 : index
    %c0_19 = arith.constant 0 : index
    %19 = vector.load %arg1[%c0_18, %c14, %c0_19] : memref<1x200x16xbf16, #tpu.memory_space<vmem>>, vector<1x168x16xbf16>
    %20 = vector.shape_cast %19 : vector<1x168x16xbf16> to vector<168x16xbf16>
    %c3 = arith.constant 3 : index
    %c0_20 = arith.constant 0 : index
    %c0_21 = arith.constant 0 : index
    %21 = vector.load %arg2[%c3, %c0_20, %c0_21] : memref<9x16x32xbf16, #tpu.memory_space<vmem>>, vector<1x16x32xbf16>
    %22 = vector.shape_cast %21 : vector<1x16x32xbf16> to vector<16x32xbf16>
    %cst_22 = arith.constant dense<0.000000e+00> : vector<168x32xf32>
    %23 = tpu.matmul %20, %22, %cst_22 {dimension_numbers = #tpu.dot_dimension_numbers<[1], [0], [0], [1], [0, 0, 1, 1], [], []>} : vector<168x16xbf16>, vector<16x32xbf16>, vector<168x32xf32> -> vector<168x32xf32>
    %24 = arith.addf %18, %23 : vector<168x32xf32>
    %c0_23 = arith.constant 0 : index
    %c15 = arith.constant 15 : index
    %c0_24 = arith.constant 0 : index
    %25 = vector.load %arg1[%c0_23, %c15, %c0_24] : memref<1x200x16xbf16, #tpu.memory_space<vmem>>, vector<1x168x16xbf16>
    %26 = vector.shape_cast %25 : vector<1x168x16xbf16> to vector<168x16xbf16>
    %c4 = arith.constant 4 : index
    %c0_25 = arith.constant 0 : index
    %c0_26 = arith.constant 0 : index
    %27 = vector.load %arg2[%c4, %c0_25, %c0_26] : memref<9x16x32xbf16, #tpu.memory_space<vmem>>, vector<1x16x32xbf16>
    %28 = vector.shape_cast %27 : vector<1x16x32xbf16> to vector<16x32xbf16>
    %cst_27 = arith.constant dense<0.000000e+00> : vector<168x32xf32>
    %29 = tpu.matmul %26, %28, %cst_27 {dimension_numbers = #tpu.dot_dimension_numbers<[1], [0], [0], [1], [0, 0, 1, 1], [], []>} : vector<168x16xbf16>, vector<16x32xbf16>, vector<168x32xf32> -> vector<168x32xf32>
    %30 = arith.addf %24, %29 : vector<168x32xf32>
    %c0_28 = arith.constant 0 : index
    %c16 = arith.constant 16 : index
    %c0_29 = arith.constant 0 : index
    %31 = vector.load %arg1[%c0_28, %c16, %c0_29] : memref<1x200x16xbf16, #tpu.memory_space<vmem>>, vector<1x168x16xbf16>
    %32 = vector.shape_cast %31 : vector<1x168x16xbf16> to vector<168x16xbf16>
    %c5 = arith.constant 5 : index
    %c0_30 = arith.constant 0 : index
    %c0_31 = arith.constant 0 : index
    %33 = vector.load %arg2[%c5, %c0_30, %c0_31] : memref<9x16x32xbf16, #tpu.memory_space<vmem>>, vector<1x16x32xbf16>
    %34 = vector.shape_cast %33 : vector<1x16x32xbf16> to vector<16x32xbf16>
    %cst_32 = arith.constant dense<0.000000e+00> : vector<168x32xf32>
    %35 = tpu.matmul %32, %34, %cst_32 {dimension_numbers = #tpu.dot_dimension_numbers<[1], [0], [0], [1], [0, 0, 1, 1], [], []>} : vector<168x16xbf16>, vector<16x32xbf16>, vector<168x32xf32> -> vector<168x32xf32>
    %36 = arith.addf %30, %35 : vector<168x32xf32>
    %c0_33 = arith.constant 0 : index
    %c28 = arith.constant 28 : index
    %c0_34 = arith.constant 0 : index
    %37 = vector.load %arg1[%c0_33, %c28, %c0_34] : memref<1x200x16xbf16, #tpu.memory_space<vmem>>, vector<1x168x16xbf16>
    %38 = vector.shape_cast %37 : vector<1x168x16xbf16> to vector<168x16xbf16>
    %c6 = arith.constant 6 : index
    %c0_35 = arith.constant 0 : index
    %c0_36 = arith.constant 0 : index
    %39 = vector.load %arg2[%c6, %c0_35, %c0_36] : memref<9x16x32xbf16, #tpu.memory_space<vmem>>, vector<1x16x32xbf16>
    %40 = vector.shape_cast %39 : vector<1x16x32xbf16> to vector<16x32xbf16>
    %cst_37 = arith.constant dense<0.000000e+00> : vector<168x32xf32>
    %41 = tpu.matmul %38, %40, %cst_37 {dimension_numbers = #tpu.dot_dimension_numbers<[1], [0], [0], [1], [0, 0, 1, 1], [], []>} : vector<168x16xbf16>, vector<16x32xbf16>, vector<168x32xf32> -> vector<168x32xf32>
    %42 = arith.addf %36, %41 : vector<168x32xf32>
    %c0_38 = arith.constant 0 : index
    %c29 = arith.constant 29 : index
    %c0_39 = arith.constant 0 : index
    %43 = vector.load %arg1[%c0_38, %c29, %c0_39] : memref<1x200x16xbf16, #tpu.memory_space<vmem>>, vector<1x168x16xbf16>
    %44 = vector.shape_cast %43 : vector<1x168x16xbf16> to vector<168x16xbf16>
    %c7 = arith.constant 7 : index
    %c0_40 = arith.constant 0 : index
    %c0_41 = arith.constant 0 : index
    %45 = vector.load %arg2[%c7, %c0_40, %c0_41] : memref<9x16x32xbf16, #tpu.memory_space<vmem>>, vector<1x16x32xbf16>
    %46 = vector.shape_cast %45 : vector<1x16x32xbf16> to vector<16x32xbf16>
    %cst_42 = arith.constant dense<0.000000e+00> : vector<168x32xf32>
    %47 = tpu.matmul %44, %46, %cst_42 {dimension_numbers = #tpu.dot_dimension_numbers<[1], [0], [0], [1], [0, 0, 1, 1], [], []>} : vector<168x16xbf16>, vector<16x32xbf16>, vector<168x32xf32> -> vector<168x32xf32>
    %48 = arith.addf %42, %47 : vector<168x32xf32>
    %c0_43 = arith.constant 0 : index
    %c30 = arith.constant 30 : index
    %c0_44 = arith.constant 0 : index
    %49 = vector.load %arg1[%c0_43, %c30, %c0_44] : memref<1x200x16xbf16, #tpu.memory_space<vmem>>, vector<1x168x16xbf16>
    %50 = vector.shape_cast %49 : vector<1x168x16xbf16> to vector<168x16xbf16>
    %c8 = arith.constant 8 : index
    %c0_45 = arith.constant 0 : index
    %c0_46 = arith.constant 0 : index
    %51 = vector.load %arg2[%c8, %c0_45, %c0_46] : memref<9x16x32xbf16, #tpu.memory_space<vmem>>, vector<1x16x32xbf16>
    %52 = vector.shape_cast %51 : vector<1x16x32xbf16> to vector<16x32xbf16>
    %cst_47 = arith.constant dense<0.000000e+00> : vector<168x32xf32>
    %53 = tpu.matmul %50, %52, %cst_47 {dimension_numbers = #tpu.dot_dimension_numbers<[1], [0], [0], [1], [0, 0, 1, 1], [], []>} : vector<168x16xbf16>, vector<16x32xbf16>, vector<168x32xf32> -> vector<168x32xf32>
    %54 = arith.addf %48, %53 : vector<168x32xf32>
    %c0_48 = arith.constant 0 : index
    %c0_49 = arith.constant 0 : index
    %55 = vector.load %arg3[%c0_48, %c0_49] : memref<1x32xf32, #tpu.memory_space<vmem>>, vector<1x32xf32>
    %56 = vector.broadcast %55 : vector<1x32xf32> to vector<168x32xf32>
    %57 = arith.addf %54, %56 : vector<168x32xf32>
    %cst_50 = arith.constant 0.000000e+00 : f32
    %58 = vector.broadcast %cst_50 : f32 to vector<168x32xf32>
    %59 = arith.cmpf ogt, %57, %58 : vector<168x32xf32>
    %cst_51 = arith.constant 2.000000e-01 : f32
    %60 = vector.broadcast %cst_51 : f32 to vector<168x32xf32>
    %61 = arith.mulf %60, %57 : vector<168x32xf32>
    %62 = arith.select %59, %57, %61 : vector<168x32xi1>, vector<168x32xf32>
    %63 = arith.truncf %62 : vector<168x32xf32> to vector<168x32xbf16>
    %c0_52 = arith.constant 0 : index
    %c0_53 = arith.constant 0 : index
    %c0_54 = arith.constant 0 : index
    %64 = vector.load %arg4[%c0_52, %c0_53, %c0_54] : memref<1x168x32xbf16, #tpu.memory_space<vmem>>, vector<1x168x32xbf16>
    %65 = vector.shape_cast %64 : vector<1x168x32xbf16> to vector<168x32xbf16>
    %66 = vector.shape_cast %63 : vector<168x32xbf16> to vector<1x168x32xbf16>
    tpu.vector_store %arg4[%c0_52, %c0_53, %c0_54], %66 {strides = array<i32>} : memref<1x168x32xbf16, #tpu.memory_space<vmem>>, vector<1x168x32xbf16>,
    return
  }
  func.func @transform_0(%arg0: i32) -> (i32, i32, i32) {
    %c0_i32 = arith.constant 0 : i32
    %c0_i32_0 = arith.constant 0 : i32
    %c0_i32_1 = arith.constant 0 : i32
    return %arg0, %c0_i32, %c0_i32_0 : i32, i32, i32
  }
  func.func @transform_1(%arg0: i32) -> (i32, i32, i32) {
    %c0_i32 = arith.constant 0 : i32
    %c0_i32_0 = arith.constant 0 : i32
    %c0_i32_1 = arith.constant 0 : i32
    %c0_i32_2 = arith.constant 0 : i32
    return %c0_i32, %c0_i32_0, %c0_i32_1 : i32, i32, i32
  }
  func.func @transform_2(%arg0: i32) -> (i32, i32) {
    %c0_i32 = arith.constant 0 : i32
    %c0_i32_0 = arith.constant 0 : i32
    %c0_i32_1 = arith.constant 0 : i32
    return %c0_i32, %c0_i32_0 : i32, i32
  }
  func.func @transform_3(%arg0: i32) -> (i32, i32, i32) {
    %c0_i32 = arith.constant 0 : i32
    %c0_i32_0 = arith.constant 0 : i32
    %c0_i32_1 = arith.constant 0 : i32
    return %arg0, %c0_i32, %c0_i32_0 : i32, i32, i32
  }
}

</mosaic_0001>

<llo_original>
// kernel: tpu_custom_call.1
$region0: #{tpu_custom_call.1}
  #allocation0 [shape = 'u32[]', space=smem, size = 0x4, offset = 0x4, fixed_abs, tag = 'smem constant byte address 0x4 - core index']
  #allocation1 [shape = 'u32[72,128]{1,0:T(1,128)}', space=vmem, size = 0x9000, scoped, tag = 'internal scratch']
  %s0 = inlined_call_operand.vmem [shape: bf16[1,200,16], index: 0, kind: input, shape index: {}]
  %s1 = inlined_call_operand.vmem [shape: bf16[9,16,32], index: 1, kind: input, shape index: {}]
  %s2 = inlined_call_operand.vmem [shape: f32[1,32], index: 2, kind: input, shape index: {}]
  %s3 = inlined_call_operand.vmem [shape: bf16[1,168,32], index: 3, kind: output, shape index: {}]
  %s4 = sld [smem:[#allocation0]]
  $region22: #{tpu_custom_call.1} parent=0
    _
  %s6 = ssub.s32 1, %s4
  %s7 = scalar_select 0, %s6, %s4
  // Predicated region
  $region2: #{tpu_custom_call.1} parent=0 // pred_check
    _
  $region3: #{tpu_custom_call.1} parent=0 // pred_check_branch
    %9 = sbr.rel (0) target = $region5
  $region4: #{tpu_custom_call.1} parent=0 // pred_region
    _
  $region5: #{tpu_custom_call.1} parent=0 // pred_fallthru
    _
  // Predicated region
  $region6: #{tpu_custom_call.1} parent=0 // pred_check
    _
  $region7: #{tpu_custom_call.1} parent=0 // pred_check_branch
    %11 = sbr.rel (0) target = $region9
  $region8: #{tpu_custom_call.1} parent=0 // pred_region
    _
  $region9: #{tpu_custom_call.1} parent=0 // pred_fallthru
    _
  // Predicated region
  $region10: #{tpu_custom_call.1} parent=0 // pred_check
    _
  $region11: #{tpu_custom_call.1} parent=0 // pred_check_branch
    %13 = sbr.rel (0) target = $region13
  $region12: #{tpu_custom_call.1} parent=0 // pred_region
    _
  $region13: #{tpu_custom_call.1} parent=0 // pred_fallthru
    _
  %v15 = vld [vmem:[%s0] sm:$0xf]
  %v16 = vld [vmem:[%s0 + $0x4] sm:$0xf]
  %v17 = vld [vmem:[%s0 + $0x8] sm:$0xf]
  %v18 = vld [vmem:[%s0 + $0xc] sm:$0xf]
  %v19 = vld [vmem:[%s0 + $0x10] sm:$0xf]
  %v20 = vld [vmem:[%s0 + $0x14] sm:$0xf]
  %v21 = vld [vmem:[%s0 + $0x18] sm:$0xf]
  %v22 = vld [vmem:[%s0 + $0x1c] sm:$0xf]
  %v23 = vld [vmem:[%s0 + $0x20] sm:$0xf]
  %v24 = vld [vmem:[%s0 + $0x24] sm:$0xf]
  %v25 = vld [vmem:[%s0 + $0x28] sm:$0xf]
  %v26 = vld [vmem:[%s0 + $0x2c] sm:$0xf]
  %v27 = vld [vmem:[%s0 + $0x30] sm:$0xf]
  %v28 = vld [vmem:[%s0 + $0x34] sm:$0xf]
  %v29 = vld [vmem:[%s0 + $0x38] sm:$0xf]
  %v30 = vld [vmem:[%s0 + $0x3c] sm:$0xf]
  %v31 = vld [vmem:[%s0 + $0x40] sm:$0xf]
  %v32 = vld [vmem:[%s0 + $0x44] sm:$0xf]
  %v33 = vld [vmem:[%s0 + $0x48] sm:$0xf]
  %v34 = vld [vmem:[%s0 + $0x4c] sm:$0xf]
  %v35 = vld [vmem:[%s0 + $0x50] sm:$0xf]
  %v36 = vld [vmem:[%s1] sm:$0xf]
  %v37 = vld [vmem:[%s1 + $0x4] sm:$0xf]
  %v38 = vld [vmem:[%s0 + $0x54] sm:$0x1]
  %s39 = scalar_lea.vmem %s1, 8
  %v40 = vld [vmem:[%s39] sm:$0xf]
  %v41 = vld [vmem:[%s39 + $0x4] sm:$0xf]
  %v64 = vunpack.c.l.b16 %v15
  %v65 = vunpack.c.l.b16 %v16
  %v66 = vunpack.c.l.b16 %v17
  %v67 = vunpack.c.l.b16 %v18
  %v68 = vunpack.c.l.b16 %v19
  %v69 = vunpack.c.l.b16 %v20
  %v70 = vunpack.c.l.b16 %v21
  %v71 = vunpack.c.l.b16 %v22
  %v72 = vunpack.c.l.b16 %v23
  %v73 = vunpack.c.l.b16 %v24
  %v74 = vunpack.c.l.b16 %v25
  %v75 = vunpack.c.l.b16 %v26
  %v76 = vunpack.c.l.b16 %v27
  %v77 = vunpack.c.l.b16 %v28
  %v78 = vunpack.c.l.b16 %v29
  %v79 = vunpack.c.l.b16 %v30
  %v80 = vunpack.c.l.b16 %v31
  %v81 = vunpack.c.l.b16 %v32
  %v82 = vunpack.c.l.b16 %v33
  %v83 = vunpack.c.l.b16 %v34
  %v84 = vunpack.c.l.b16 %v35
  %v85 = vunpack.c.l.b16 %v38
  %v86 = vpack.c.b16 %v65, %v64
  %v87 = vpack.c.b16 %v67, %v66
  %v88 = vpack.c.b16 %v69, %v68
  %v89 = vpack.c.b16 %v71, %v70
  %v90 = vpack.c.b16 %v73, %v72
  %v91 = vpack.c.b16 %v75, %v74
  %v92 = vpack.c.b16 %v77, %v76
  %v93 = vpack.c.b16 %v79, %v78
  %v94 = vpack.c.b16 %v81, %v80
  %v95 = vpack.c.b16 %v83, %v82
  %v96 = vpack.c.b16 %v85, %v84
  %vm97 = vsmask.f32 7424
  %v99 = vshrl.u32 %v86, 16
  %v101 = vshll.u32 %v86, 16
  %v103 = vrot.slane %v101, 1
  %v104 = vor.u32 %v99, %v103
  %v106 = vshll.u32 %v87, 16
  %v108 = vrot.slane %v106, 1
  %v109 = vsel %vm97, %v104, %v108
  %v110 = vshrl.u32 %v87, 16
  %v112 = vor.u32 %v110, %v108
  %v114 = vshll.u32 %v88, 16
  %v116 = vrot.slane %v114, 1
  %v117 = vsel %vm97, %v112, %v116
  %v118 = vshrl.u32 %v88, 16
  %v120 = vor.u32 %v118, %v116
  %v122 = vshll.u32 %v89, 16
  %v124 = vrot.slane %v122, 1
  %v125 = vsel %vm97, %v120, %v124
  %v126 = vshrl.u32 %v89, 16
  %v128 = vor.u32 %v126, %v124
  %v130 = vshll.u32 %v90, 16
  %v132 = vrot.slane %v130, 1
  %v133 = vsel %vm97, %v128, %v132
  %v134 = vshrl.u32 %v90, 16
  %v136 = vor.u32 %v134, %v132
  %v138 = vshll.u32 %v91, 16
  %v140 = vrot.slane %v138, 1
  %v141 = vsel %vm97, %v136, %v140
  %v142 = vshrl.u32 %v91, 16
  %v144 = vor.u32 %v142, %v140
  %v146 = vshll.u32 %v92, 16
  %v148 = vrot.slane %v146, 1
  %v149 = vsel %vm97, %v144, %v148
  %v150 = vshrl.u32 %v92, 16
  %v152 = vor.u32 %v150, %v148
  %v154 = vshll.u32 %v93, 16
  %v156 = vrot.slane %v154, 1
  %v157 = vsel %vm97, %v152, %v156
  %v158 = vshrl.u32 %v93, 16
  %v160 = vor.u32 %v158, %v156
  %v162 = vshll.u32 %v94, 16
  %v164 = vrot.slane %v162, 1
  %v165 = vsel %vm97, %v160, %v164
  %v166 = vshrl.u32 %v94, 16
  %v168 = vor.u32 %v166, %v164
  %v170 = vshll.u32 %v95, 16
  %v172 = vrot.slane %v170, 1
  %v173 = vsel %vm97, %v168, %v172
  %v174 = vshrl.u32 %v95, 16
  %v176 = vor.u32 %v174, %v172
  %v178 = vshll.u32 %v96, 16
  %v180 = vrot.slane %v178, 1
  %v181 = vsel %vm97, %v176, %v180
  %v182 = vshrl.u32 %v96, 16
  %v184 = vor.u32 %v182, %v180
  %v187 = vunpack.c.l.b16 %v40
  %v188 = vunpack.c.l.b16 %v41
  %v189 = vpack.c.b16 %v188, %v187
  %vm191 = vcmask 130048
  %v193 = vsel %vm191, %v109, 0
  %v196 = vsel %vm191, %v117, 0
  %v199 = vsel %vm191, %v125, 0
  %v202 = vsel %vm191, %v133, 0
  %v205 = vsel %vm191, %v141, 0
  %v208 = vsel %vm191, %v149, 0
  %v211 = vsel %vm191, %v157, 0
  %v214 = vsel %vm191, %v165, 0
  %v217 = vsel %vm191, %v173, 0
  %v220 = vsel %vm191, %v181, 0
  %v223 = vsel %vm191, %v184, 0
  %225 = vmatpush.bf16.msra.mxu0 0
  %226 = vmatpush.bf16.msra.mxu0 0
  %227 = vmatpush.bf16.msra.mxu0 0
  %228 = vmatpush.bf16.msra.mxu0 0
  %229 = vmatpush.bf16.msra.mxu0 0
  %230 = vmatpush.bf16.msra.mxu0 0
  %231 = vmatpush.bf16.msra.mxu0 0
  %232 = vmatpush.bf16.msra.mxu0 %v189
  %233 = vmatmul.bf16.gmra.mxu0 %v193
  %v234 = vpop.f32.mrf.mxu0
  %v235 = vadd.f32 0.0, %v234
  %v236 = vpop.f32.mrf.mxu0
  %v237 = vadd.f32 0.0, %v236
  %238 = vmatmul.bf16.gmra.mxu0 %v196
  %v239 = vpop.f32.mrf.mxu0
  %v240 = vadd.f32 0.0, %v239
  %v241 = vpop.f32.mrf.mxu0
  %v242 = vadd.f32 0.0, %v241
  %243 = vmatmul.bf16.gmra.mxu0 %v199
  %v244 = vpop.f32.mrf.mxu0
  %v245 = vadd.f32 0.0, %v244
  %v246 = vpop.f32.mrf.mxu0
  %v247 = vadd.f32 0.0, %v246
  %248 = vmatmul.bf16.gmra.mxu0 %v202
  %v249 = vpop.f32.mrf.mxu0
  %v250 = vadd.f32 0.0, %v249
  %v251 = vpop.f32.mrf.mxu0
  %v252 = vadd.f32 0.0, %v251
  %253 = vmatmul.bf16.gmra.mxu0 %v205
  %v254 = vpop.f32.mrf.mxu0
  %v255 = vadd.f32 0.0, %v254
  %v256 = vpop.f32.mrf.mxu0
  %v257 = vadd.f32 0.0, %v256
  %258 = vmatmul.bf16.gmra.mxu0 %v208
  %v259 = vpop.f32.mrf.mxu0
  %v260 = vadd.f32 0.0, %v259
  %v261 = vpop.f32.mrf.mxu0
  %v262 = vadd.f32 0.0, %v261
  %263 = vmatmul.bf16.gmra.mxu0 %v211
  %v264 = vpop.f32.mrf.mxu0
  %v265 = vadd.f32 0.0, %v264
  %v266 = vpop.f32.mrf.mxu0
  %v267 = vadd.f32 0.0, %v266
  %268 = vmatmul.bf16.gmra.mxu0 %v214
  %v269 = vpop.f32.mrf.mxu0
  %v270 = vadd.f32 0.0, %v269
  %v271 = vpop.f32.mrf.mxu0
  %v272 = vadd.f32 0.0, %v271
  %273 = vmatmul.bf16.gmra.mxu0 %v217
  %v274 = vpop.f32.mrf.mxu0
  %v275 = vadd.f32 0.0, %v274
  %v276 = vpop.f32.mrf.mxu0
  %v277 = vadd.f32 0.0, %v276
  %278 = vmatmul.bf16.gmra.mxu0 %v220
  %v279 = vpop.f32.mrf.mxu0
  %v280 = vadd.f32 0.0, %v279
  %v281 = vpop.f32.mrf.mxu0
  %v282 = vadd.f32 0.0, %v281
  %283 = vmatmul.bf16.gmra.mxu0 %v223
  %v284 = vpop.f32.mrf.mxu0
  %v285 = vadd.f32 0.0, %v284
  %v286 = vpop.f32.mrf.mxu0
  %287 = vdwg.mxu0
  %v288 = vpack.c.b16 %v84, %v84
  %v291 = vunpack.c.l.b16 %v36
  %v292 = vunpack.c.l.b16 %v37
  %v293 = vpack.c.b16 %v292, %v291
  %v295 = vsel %vm191, %v86, 0
  %v297 = vsel %vm191, %v87, 0
  %v299 = vsel %vm191, %v88, 0
  %v301 = vsel %vm191, %v89, 0
  %v303 = vsel %vm191, %v90, 0
  %v305 = vsel %vm191, %v91, 0
  %v307 = vsel %vm191, %v92, 0
  %v309 = vsel %vm191, %v93, 0
  %v311 = vsel %vm191, %v94, 0
  %v313 = vsel %vm191, %v95, 0
  %v316 = vsel %vm191, %v288, 0
  %318 = vmatpush.bf16.msra.mxu0 0
  %319 = vmatpush.bf16.msra.mxu0 0
  %320 = vmatpush.bf16.msra.mxu0 0
  %321 = vmatpush.bf16.msra.mxu0 0
  %322 = vmatpush.bf16.msra.mxu0 0
  %323 = vmatpush.bf16.msra.mxu0 0
  %324 = vmatpush.bf16.msra.mxu0 0
  %325 = vmatpush.bf16.msra.mxu0 %v293
  %326 = vmatmul.bf16.gmra.mxu0 %v295
  %v327 = vpop.f32.mrf.mxu0
  %v328 = vadd.f32 %v235, %v327
  %v329 = vpop.f32.mrf.mxu0
  %v330 = vadd.f32 %v237, %v329
  %331 = vmatmul.bf16.gmra.mxu0 %v297
  %v332 = vpop.f32.mrf.mxu0
  %v333 = vadd.f32 %v240, %v332
  %v334 = vpop.f32.mrf.mxu0
  %v335 = vadd.f32 %v242, %v334
  %336 = vmatmul.bf16.gmra.mxu0 %v299
  %v337 = vpop.f32.mrf.mxu0
  %v338 = vadd.f32 %v245, %v337
  %v339 = vpop.f32.mrf.mxu0
  %v340 = vadd.f32 %v247, %v339
  %341 = vmatmul.bf16.gmra.mxu0 %v301
  %v342 = vpop.f32.mrf.mxu0
  %v343 = vadd.f32 %v250, %v342
  %v344 = vpop.f32.mrf.mxu0
  %v345 = vadd.f32 %v252, %v344
  %346 = vmatmul.bf16.gmra.mxu0 %v303
  %v347 = vpop.f32.mrf.mxu0
  %v348 = vadd.f32 %v255, %v347
  %v349 = vpop.f32.mrf.mxu0
  %v350 = vadd.f32 %v257, %v349
  %351 = vmatmul.bf16.gmra.mxu0 %v305
  %v352 = vpop.f32.mrf.mxu0
  %v353 = vadd.f32 %v260, %v352
  %v354 = vpop.f32.mrf.mxu0
  %v355 = vadd.f32 %v262, %v354
  %356 = vmatmul.bf16.gmra.mxu0 %v307
  %v357 = vpop.f32.mrf.mxu0
  %v358 = vadd.f32 %v265, %v357
  %v359 = vpop.f32.mrf.mxu0
  %v360 = vadd.f32 %v267, %v359
  %361 = vmatmul.bf16.gmra.mxu0 %v309
  %v362 = vpop.f32.mrf.mxu0
  %v363 = vadd.f32 %v270, %v362
  %v364 = vpop.f32.mrf.mxu0
  %v365 = vadd.f32 %v272, %v364
  %366 = vmatmul.bf16.gmra.mxu0 %v311
  %v367 = vpop.f32.mrf.mxu0
  %v368 = vadd.f32 %v275, %v367
  %v369 = vpop.f32.mrf.mxu0
  %v370 = vadd.f32 %v277, %v369
  %371 = vmatmul.bf16.gmra.mxu0 %v313
  %v372 = vpop.f32.mrf.mxu0
  %v373 = vadd.f32 %v280, %v372
  %v374 = vpop.f32.mrf.mxu0
  %v375 = vadd.f32 %v282, %v374
  %376 = vmatmul.bf16.gmra.mxu0 %v316
  %v377 = vpop.f32.mrf.mxu0
  %v378 = vadd.f32 %v285, %v377
  %v379 = vpop.f32.mrf.mxu0
  %380 = vdwg.mxu0
  %v381 = vld [vmem:[%s0] sm:$0xe]
  %s382 = scalar_lea.vmem %s1, 16
  %v383 = vld [vmem:[%s382] sm:$0xf]
  %v384 = vld [vmem:[%s382 + $0x4] sm:$0xf]
  %v386 = vunpack.c.l.b16 %v381
  %v387 = vpack.c.b16 %v65, %v386
  %vm388 = vcmask 1046528
  %v389 = vrot.slane %v387, 1
  %v390 = vrot.slane %v87, 1
  %v391 = vsel %vm388, %v389, %v390
  %v392 = vrot.slane %v88, 1
  %v393 = vsel %vm388, %v390, %v392
  %v394 = vrot.slane %v89, 1
  %v395 = vsel %vm388, %v392, %v394
  %v396 = vrot.slane %v90, 1
  %v397 = vsel %vm388, %v394, %v396
  %v398 = vrot.slane %v91, 1
  %v399 = vsel %vm388, %v396, %v398
  %v400 = vrot.slane %v92, 1
  %v401 = vsel %vm388, %v398, %v400
  %v402 = vrot.slane %v93, 1
  %v403 = vsel %vm388, %v400, %v402
  %v404 = vrot.slane %v94, 1
  %v405 = vsel %vm388, %v402, %v404
  %v406 = vrot.slane %v95, 1
  %v407 = vsel %vm388, %v404, %v406
  %v408 = vrot.slane %v96, 1
  %v409 = vsel %vm388, %v406, %v408
  %v412 = vunpack.c.l.b16 %v383
  %v413 = vunpack.c.l.b16 %v384
  %v414 = vpack.c.b16 %v413, %v412
  %v417 = vsel %vm191, %v391, 0
  %v420 = vsel %vm191, %v393, 0
  %v423 = vsel %vm191, %v395, 0
  %v426 = vsel %vm191, %v397, 0
  %v429 = vsel %vm191, %v399, 0
  %v432 = vsel %vm191, %v401, 0
  %v435 = vsel %vm191, %v403, 0
  %v438 = vsel %vm191, %v405, 0
  %v441 = vsel %vm191, %v407, 0
  %v444 = vsel %vm191, %v409, 0
  %v447 = vsel %vm191, %v408, 0
  %449 = vmatpush.bf16.msra.mxu0 0
  %450 = vmatpush.bf16.msra.mxu0 0
  %451 = vmatpush.bf16.msra.mxu0 0
  %452 = vmatpush.bf16.msra.mxu0 0
  %453 = vmatpush.bf16.msra.mxu0 0
  %454 = vmatpush.bf16.msra.mxu0 0
  %455 = vmatpush.bf16.msra.mxu0 0
  %456 = vmatpush.bf16.msra.mxu0 %v414
  %457 = vmatmul.bf16.gmra.mxu0 %v417
  %v458 = vpop.f32.mrf.mxu0
  %v459 = vadd.f32 0.0, %v458
  %v460 = vpop.f32.mrf.mxu0
  %v461 = vadd.f32 0.0, %v460
  %462 = vmatmul.bf16.gmra.mxu0 %v420
  %v463 = vpop.f32.mrf.mxu0
  %v464 = vadd.f32 0.0, %v463
  %v465 = vpop.f32.mrf.mxu0
  %v466 = vadd.f32 0.0, %v465
  %467 = vmatmul.bf16.gmra.mxu0 %v423
  %v468 = vpop.f32.mrf.mxu0
  %v469 = vadd.f32 0.0, %v468
  %v470 = vpop.f32.mrf.mxu0
  %v471 = vadd.f32 0.0, %v470
  %472 = vmatmul.bf16.gmra.mxu0 %v426
  %v473 = vpop.f32.mrf.mxu0
  %v474 = vadd.f32 0.0, %v473
  %v475 = vpop.f32.mrf.mxu0
  %v476 = vadd.f32 0.0, %v475
  %477 = vmatmul.bf16.gmra.mxu0 %v429
  %v478 = vpop.f32.mrf.mxu0
  %v479 = vadd.f32 0.0, %v478
  %v480 = vpop.f32.mrf.mxu0
  %v481 = vadd.f32 0.0, %v480
  %482 = vmatmul.bf16.gmra.mxu0 %v432
  %v483 = vpop.f32.mrf.mxu0
  %v484 = vadd.f32 0.0, %v483
  %v485 = vpop.f32.mrf.mxu0
  %v486 = vadd.f32 0.0, %v485
  %487 = vmatmul.bf16.gmra.mxu0 %v435
  %v488 = vpop.f32.mrf.mxu0
  %v489 = vadd.f32 0.0, %v488
  %v490 = vpop.f32.mrf.mxu0
  %v491 = vadd.f32 0.0, %v490
  %492 = vmatmul.bf16.gmra.mxu0 %v438
  %v493 = vpop.f32.mrf.mxu0
  %v494 = vadd.f32 0.0, %v493
  %v495 = vpop.f32.mrf.mxu0
  %v496 = vadd.f32 0.0, %v495
  %497 = vmatmul.bf16.gmra.mxu0 %v441
  %v498 = vpop.f32.mrf.mxu0
  %v499 = vadd.f32 0.0, %v498
  %v500 = vpop.f32.mrf.mxu0
  %v501 = vadd.f32 0.0, %v500
  %502 = vmatmul.bf16.gmra.mxu0 %v444
  %v503 = vpop.f32.mrf.mxu0
  %v504 = vadd.f32 0.0, %v503
  %v505 = vpop.f32.mrf.mxu0
  %v506 = vadd.f32 0.0, %v505
  %507 = vmatmul.bf16.gmra.mxu0 %v447
  %v508 = vpop.f32.mrf.mxu0
  %v509 = vadd.f32 0.0, %v508
  %v510 = vpop.f32.mrf.mxu0
  %511 = vdwg.mxu0
  %v512 = vadd.f32 %v328, %v459
  %v513 = vadd.f32 %v330, %v461
  %v514 = vadd.f32 %v333, %v464
  %v515 = vadd.f32 %v335, %v466
  %v516 = vadd.f32 %v338, %v469
  %v517 = vadd.f32 %v340, %v471
  %v518 = vadd.f32 %v343, %v474
  %v519 = vadd.f32 %v345, %v476
  %v520 = vadd.f32 %v348, %v479
  %v521 = vadd.f32 %v350, %v481
  %v522 = vadd.f32 %v353, %v484
  %v523 = vadd.f32 %v355, %v486
  %v524 = vadd.f32 %v358, %v489
  %v525 = vadd.f32 %v360, %v491
  %v526 = vadd.f32 %v363, %v494
  %v527 = vadd.f32 %v365, %v496
  %v528 = vadd.f32 %v368, %v499
  %v529 = vadd.f32 %v370, %v501
  %v530 = vadd.f32 %v373, %v504
  %v531 = vadd.f32 %v375, %v506
  %v532 = vadd.f32 %v378, %v509
  %v533 = vld [vmem:[%s0 + $0x4] sm:$0x8]
  %v534 = vld [vmem:[%s0 + $0x8] sm:$0xf]
  %v535 = vld [vmem:[%s0 + $0xc] sm:$0xf]
  %v536 = vld [vmem:[%s0 + $0x10] sm:$0xf]
  %v537 = vld [vmem:[%s0 + $0x14] sm:$0xf]
  %v538 = vld [vmem:[%s0 + $0x18] sm:$0xf]
  %v539 = vld [vmem:[%s0 + $0x1c] sm:$0xf]
  %v540 = vld [vmem:[%s0 + $0x20] sm:$0xf]
  %v541 = vld [vmem:[%s0 + $0x24] sm:$0xf]
  %v542 = vld [vmem:[%s0 + $0x28] sm:$0xf]
  %v543 = vld [vmem:[%s0 + $0x2c] sm:$0xf]
  %v544 = vld [vmem:[%s0 + $0x30] sm:$0xf]
  %v545 = vld [vmem:[%s0 + $0x34] sm:$0xf]
  %v546 = vld [vmem:[%s0 + $0x38] sm:$0xf]
  %v547 = vld [vmem:[%s0 + $0x3c] sm:$0xf]
  %v548 = vld [vmem:[%s0 + $0x40] sm:$0xf]
  %v549 = vld [vmem:[%s0 + $0x44] sm:$0xf]
  %v550 = vld [vmem:[%s0 + $0x48] sm:$0xf]
  %v551 = vld [vmem:[%s0 + $0x4c] sm:$0xf]
  %v552 = vld [vmem:[%s0 + $0x50] sm:$0xf]
  %v553 = vld [vmem:[%s0 + $0x54] sm:$0xf]
  %v554 = vld [vmem:[%s0 + $0x58] sm:$0x7]
  %s555 = scalar_lea.vmem %s1, 24
  %v556 = vld [vmem:[%s555] sm:$0xf]
  %v557 = vld [vmem:[%s555 + $0x4] sm:$0xf]
  %v580 = vunpack.c.l.b16 %v533
  %v581 = vunpack.c.l.b16 %v534
  %v582 = vunpack.c.l.b16 %v535
  %v583 = vunpack.c.l.b16 %v536
  %v584 = vunpack.c.l.b16 %v537
  %v585 = vunpack.c.l.b16 %v538
  %v586 = vunpack.c.l.b16 %v539
  %v587 = vunpack.c.l.b16 %v540
  %v588 = vunpack.c.l.b16 %v541
  %v589 = vunpack.c.l.b16 %v542
  %v590 = vunpack.c.l.b16 %v543
  %v591 = vunpack.c.l.b16 %v544
  %v592 = vunpack.c.l.b16 %v545
  %v593 = vunpack.c.l.b16 %v546
  %v594 = vunpack.c.l.b16 %v547
  %v595 = vunpack.c.l.b16 %v548
  %v596 = vunpack.c.l.b16 %v549
  %v597 = vunpack.c.l.b16 %v550
  %v598 = vunpack.c.l.b16 %v551
  %v599 = vunpack.c.l.b16 %v552
  %v600 = vunpack.c.l.b16 %v553
  %v601 = vunpack.c.l.b16 %v554
  %v602 = vpack.c.b16 %v581, %v580
  %v603 = vpack.c.b16 %v583, %v582
  %v604 = vpack.c.b16 %v585, %v584
  %v605 = vpack.c.b16 %v587, %v586
  %v606 = vpack.c.b16 %v589, %v588
  %v607 = vpack.c.b16 %v591, %v590
  %v608 = vpack.c.b16 %v593, %v592
  %v609 = vpack.c.b16 %v595, %v594
  %v610 = vpack.c.b16 %v597, %v596
  %v611 = vpack.c.b16 %v599, %v598
  %v612 = vpack.c.b16 %v601, %v600
  %vm613 = vcmask 1044480
  %v614 = vrot.slane %v602, 3
  %v615 = vrot.slane %v603, 3
  %v616 = vsel %vm613, %v614, %v615
  %v617 = vrot.slane %v604, 3
  %v618 = vsel %vm613, %v615, %v617
  %v619 = vrot.slane %v605, 3
  %v620 = vsel %vm613, %v617, %v619
  %v621 = vrot.slane %v606, 3
  %v622 = vsel %vm613, %v619, %v621
  %v623 = vrot.slane %v607, 3
  %v624 = vsel %vm613, %v621, %v623
  %v625 = vrot.slane %v608, 3
  %v626 = vsel %vm613, %v623, %v625
  %v627 = vrot.slane %v609, 3
  %v628 = vsel %vm613, %v625, %v627
  %v629 = vrot.slane %v610, 3
  %v630 = vsel %vm613, %v627, %v629
  %v631 = vrot.slane %v611, 3
  %v632 = vsel %vm613, %v629, %v631
  %v633 = vrot.slane %v612, 3
  %v634 = vsel %vm613, %v631, %v633
  %v637 = vunpack.c.l.b16 %v556
  %v638 = vunpack.c.l.b16 %v557
  %v639 = vpack.c.b16 %v638, %v637
  %v642 = vsel %vm191, %v616, 0
  %v645 = vsel %vm191, %v618, 0
  %v648 = vsel %vm191, %v620, 0
  %v651 = vsel %vm191, %v622, 0
  %v654 = vsel %vm191, %v624, 0
  %v657 = vsel %vm191, %v626, 0
  %v660 = vsel %vm191, %v628, 0
  %v663 = vsel %vm191, %v630, 0
  %v666 = vsel %vm191, %v632, 0
  %v669 = vsel %vm191, %v634, 0
  %v672 = vsel %vm191, %v633, 0
  %674 = vmatpush.bf16.msra.mxu0 0
  %675 = vmatpush.bf16.msra.mxu0 0
  %676 = vmatpush.bf16.msra.mxu0 0
  %677 = vmatpush.bf16.msra.mxu0 0
  %678 = vmatpush.bf16.msra.mxu0 0
  %679 = vmatpush.bf16.msra.mxu0 0
  %680 = vmatpush.bf16.msra.mxu0 0
  %681 = vmatpush.bf16.msra.mxu0 %v639
  %682 = vmatmul.bf16.gmra.mxu0 %v642
  %v683 = vpop.f32.mrf.mxu0
  %v684 = vadd.f32 0.0, %v683
  %v685 = vpop.f32.mrf.mxu0
  %v686 = vadd.f32 0.0, %v685
  %687 = vmatmul.bf16.gmra.mxu0 %v645
  %v688 = vpop.f32.mrf.mxu0
  %v689 = vadd.f32 0.0, %v688
  %v690 = vpop.f32.mrf.mxu0
  %v691 = vadd.f32 0.0, %v690
  %692 = vmatmul.bf16.gmra.mxu0 %v648
  %v693 = vpop.f32.mrf.mxu0
  %v694 = vadd.f32 0.0, %v693
  %v695 = vpop.f32.mrf.mxu0
  %v696 = vadd.f32 0.0, %v695
  %697 = vmatmul.bf16.gmra.mxu0 %v651
  %v698 = vpop.f32.mrf.mxu0
  %v699 = vadd.f32 0.0, %v698
  %v700 = vpop.f32.mrf.mxu0
  %v701 = vadd.f32 0.0, %v700
  %702 = vmatmul.bf16.gmra.mxu0 %v654
  %v703 = vpop.f32.mrf.mxu0
  %v704 = vadd.f32 0.0, %v703
  %v705 = vpop.f32.mrf.mxu0
  %v706 = vadd.f32 0.0, %v705
  %707 = vmatmul.bf16.gmra.mxu0 %v657
  %v708 = vpop.f32.mrf.mxu0
  %v709 = vadd.f32 0.0, %v708
  %v710 = vpop.f32.mrf.mxu0
  %v711 = vadd.f32 0.0, %v710
  %712 = vmatmul.bf16.gmra.mxu0 %v660
  %v713 = vpop.f32.mrf.mxu0
  %v714 = vadd.f32 0.0, %v713
  %v715 = vpop.f32.mrf.mxu0
  %v716 = vadd.f32 0.0, %v715
  %717 = vmatmul.bf16.gmra.mxu0 %v663
  %v718 = vpop.f32.mrf.mxu0
  %v719 = vadd.f32 0.0, %v718
  %v720 = vpop.f32.mrf.mxu0
  %v721 = vadd.f32 0.0, %v720
  %722 = vmatmul.bf16.gmra.mxu0 %v666
  %v723 = vpop.f32.mrf.mxu0
  %v724 = vadd.f32 0.0, %v723
  %v725 = vpop.f32.mrf.mxu0
  %v726 = vadd.f32 0.0, %v725
  %727 = vmatmul.bf16.gmra.mxu0 %v669
  %v728 = vpop.f32.mrf.mxu0
  %v729 = vadd.f32 0.0, %v728
  %v730 = vpop.f32.mrf.mxu0
  %v731 = vadd.f32 0.0, %v730
  %732 = vmatmul.bf16.gmra.mxu0 %v672
  %v733 = vpop.f32.mrf.mxu0
  %v734 = vadd.f32 0.0, %v733
  %v735 = vpop.f32.mrf.mxu0
  %736 = vdwg.mxu0
  %v737 = vadd.f32 %v512, %v684
  %v738 = vadd.f32 %v513, %v686
  %v739 = vadd.f32 %v514, %v689
  %v740 = vadd.f32 %v515, %v691
  %v741 = vadd.f32 %v516, %v694
  %v742 = vadd.f32 %v517, %v696
  %v743 = vadd.f32 %v518, %v699
  %v744 = vadd.f32 %v519, %v701
  %v745 = vadd.f32 %v520, %v704
  %v746 = vadd.f32 %v521, %v706
  %v747 = vadd.f32 %v522, %v709
  %v748 = vadd.f32 %v523, %v711
  %v749 = vadd.f32 %v524, %v714
  %v750 = vadd.f32 %v525, %v716
  %v751 = vadd.f32 %v526, %v719
  %v752 = vadd.f32 %v527, %v721
  %v753 = vadd.f32 %v528, %v724
  %v754 = vadd.f32 %v529, %v726
  %v755 = vadd.f32 %v530, %v729
  %v756 = vadd.f32 %v531, %v731
  %v757 = vadd.f32 %v532, %v734
  %v758 = vld [vmem:[%s0 + $0x58] sm:$0xf]
  %s759 = scalar_lea.vmem %s1, 32
  %v760 = vld [vmem:[%s759] sm:$0xf]
  %v761 = vld [vmem:[%s759 + $0x4] sm:$0xf]
  %v763 = vunpack.c.l.b16 %v758
  %v764 = vpack.c.b16 %v763, %v600
  %vm765 = vsmask.f32 4352
  %v767 = vshrl.u32 %v602, 16
  %v769 = vrot.slane %v767, 3
  %v770 = vshll.u32 %v602, 16
  %v772 = vrot.slane %v770, 4
  %v773 = vor.u32 %v769, %v772
  %v775 = vshrl.u32 %v603, 16
  %v777 = vrot.slane %v775, 3
  %v778 = vshll.u32 %v603, 16
  %v780 = vrot.slane %v778, 4
  %v781 = vor.u32 %v777, %v780
  %v782 = vsel %vm765, %v773, %v781
  %v784 = vshrl.u32 %v604, 16
  %v786 = vrot.slane %v784, 3
  %v787 = vshll.u32 %v604, 16
  %v789 = vrot.slane %v787, 4
  %v790 = vor.u32 %v786, %v789
  %v791 = vsel %vm765, %v781, %v790
  %v793 = vshrl.u32 %v605, 16
  %v795 = vrot.slane %v793, 3
  %v796 = vshll.u32 %v605, 16
  %v798 = vrot.slane %v796, 4
  %v799 = vor.u32 %v795, %v798
  %v800 = vsel %vm765, %v790, %v799
  %v802 = vshrl.u32 %v606, 16
  %v804 = vrot.slane %v802, 3
  %v805 = vshll.u32 %v606, 16
  %v807 = vrot.slane %v805, 4
  %v808 = vor.u32 %v804, %v807
  %v809 = vsel %vm765, %v799, %v808
  %v811 = vshrl.u32 %v607, 16
  %v813 = vrot.slane %v811, 3
  %v814 = vshll.u32 %v607, 16
  %v816 = vrot.slane %v814, 4
  %v817 = vor.u32 %v813, %v816
  %v818 = vsel %vm765, %v808, %v817
  %v820 = vshrl.u32 %v608, 16
  %v822 = vrot.slane %v820, 3
  %v823 = vshll.u32 %v608, 16
  %v825 = vrot.slane %v823, 4
  %v826 = vor.u32 %v822, %v825
  %v827 = vsel %vm765, %v817, %v826
  %v829 = vshrl.u32 %v609, 16
  %v831 = vrot.slane %v829, 3
  %v832 = vshll.u32 %v609, 16
  %v834 = vrot.slane %v832, 4
  %v835 = vor.u32 %v831, %v834
  %v836 = vsel %vm765, %v826, %v835
  %v838 = vshrl.u32 %v610, 16
  %v840 = vrot.slane %v838, 3
  %v841 = vshll.u32 %v610, 16
  %v843 = vrot.slane %v841, 4
  %v844 = vor.u32 %v840, %v843
  %v845 = vsel %vm765, %v835, %v844
  %v847 = vshrl.u32 %v611, 16
  %v849 = vrot.slane %v847, 3
  %v850 = vshll.u32 %v611, 16
  %v852 = vrot.slane %v850, 4
  %v853 = vor.u32 %v849, %v852
  %v854 = vsel %vm765, %v844, %v853
  %v856 = vshrl.u32 %v764, 16
  %v858 = vrot.slane %v856, 3
  %v859 = vshll.u32 %v764, 16
  %v861 = vrot.slane %v859, 4
  %v862 = vor.u32 %v858, %v861
  %v863 = vsel %vm765, %v853, %v862
  %v866 = vunpack.c.l.b16 %v760
  %v867 = vunpack.c.l.b16 %v761
  %v868 = vpack.c.b16 %v867, %v866
  %v871 = vsel %vm191, %v782, 0
  %v874 = vsel %vm191, %v791, 0
  %v877 = vsel %vm191, %v800, 0
  %v880 = vsel %vm191, %v809, 0
  %v883 = vsel %vm191, %v818, 0
  %v886 = vsel %vm191, %v827, 0
  %v889 = vsel %vm191, %v836, 0
  %v892 = vsel %vm191, %v845, 0
  %v895 = vsel %vm191, %v854, 0
  %v898 = vsel %vm191, %v863, 0
  %v901 = vsel %vm191, %v862, 0
  %903 = vmatpush.bf16.msra.mxu0 0
  %904 = vmatpush.bf16.msra.mxu0 0
  %905 = vmatpush.bf16.msra.mxu0 0
  %906 = vmatpush.bf16.msra.mxu0 0
  %907 = vmatpush.bf16.msra.mxu0 0
  %908 = vmatpush.bf16.msra.mxu0 0
  %909 = vmatpush.bf16.msra.mxu0 0
  %910 = vmatpush.bf16.msra.mxu0 %v868
  %911 = vmatmul.bf16.gmra.mxu0 %v871
  %v912 = vpop.f32.mrf.mxu0
  %v913 = vadd.f32 0.0, %v912
  %v914 = vpop.f32.mrf.mxu0
  %v915 = vadd.f32 0.0, %v914
  %916 = vmatmul.bf16.gmra.mxu0 %v874
  %v917 = vpop.f32.mrf.mxu0
  %v918 = vadd.f32 0.0, %v917
  %v919 = vpop.f32.mrf.mxu0
  %v920 = vadd.f32 0.0, %v919
  %921 = vmatmul.bf16.gmra.mxu0 %v877
  %v922 = vpop.f32.mrf.mxu0
  %v923 = vadd.f32 0.0, %v922
  %v924 = vpop.f32.mrf.mxu0
  %v925 = vadd.f32 0.0, %v924
  %926 = vmatmul.bf16.gmra.mxu0 %v880
  %v927 = vpop.f32.mrf.mxu0
  %v928 = vadd.f32 0.0, %v927
  %v929 = vpop.f32.mrf.mxu0
  %v930 = vadd.f32 0.0, %v929
  %931 = vmatmul.bf16.gmra.mxu0 %v883
  %v932 = vpop.f32.mrf.mxu0
  %v933 = vadd.f32 0.0, %v932
  %v934 = vpop.f32.mrf.mxu0
  %v935 = vadd.f32 0.0, %v934
  %936 = vmatmul.bf16.gmra.mxu0 %v886
  %v937 = vpop.f32.mrf.mxu0
  %v938 = vadd.f32 0.0, %v937
  %v939 = vpop.f32.mrf.mxu0
  %v940 = vadd.f32 0.0, %v939
  %941 = vmatmul.bf16.gmra.mxu0 %v889
  %v942 = vpop.f32.mrf.mxu0
  %v943 = vadd.f32 0.0, %v942
  %v944 = vpop.f32.mrf.mxu0
  %v945 = vadd.f32 0.0, %v944
  %946 = vmatmul.bf16.gmra.mxu0 %v892
  %v947 = vpop.f32.mrf.mxu0
  %v948 = vadd.f32 0.0, %v947
  %v949 = vpop.f32.mrf.mxu0
  %v950 = vadd.f32 0.0, %v949
  %951 = vmatmul.bf16.gmra.mxu0 %v895
  %v952 = vpop.f32.mrf.mxu0
  %v953 = vadd.f32 0.0, %v952
  %v954 = vpop.f32.mrf.mxu0
  %v955 = vadd.f32 0.0, %v954
  %956 = vmatmul.bf16.gmra.mxu0 %v898
  %v957 = vpop.f32.mrf.mxu0
  %v958 = vadd.f32 0.0, %v957
  %v959 = vpop.f32.mrf.mxu0
  %v960 = vadd.f32 0.0, %v959
  %961 = vmatmul.bf16.gmra.mxu0 %v901
  %v962 = vpop.f32.mrf.mxu0
  %v963 = vadd.f32 0.0, %v962
  %v964 = vpop.f32.mrf.mxu0
  %965 = vdwg.mxu0
  %v966 = vadd.f32 %v737, %v913
  %v967 = vadd.f32 %v738, %v915
  %v968 = vadd.f32 %v739, %v918
  %v969 = vadd.f32 %v740, %v920
  %v970 = vadd.f32 %v741, %v923
  %v971 = vadd.f32 %v742, %v925
  %v972 = vadd.f32 %v743, %v928
  %v973 = vadd.f32 %v744, %v930
  %v974 = vadd.f32 %v745, %v933
  %v975 = vadd.f32 %v746, %v935
  %v976 = vadd.f32 %v747, %v938
  %v977 = vadd.f32 %v748, %v940
  %v978 = vadd.f32 %v749, %v943
  %v979 = vadd.f32 %v750, %v945
  %v980 = vadd.f32 %v751, %v948
  %v981 = vadd.f32 %v752, %v950
  %v982 = vadd.f32 %v753, %v953
  %v983 = vadd.f32 %v754, %v955
  %v984 = vadd.f32 %v755, %v958
  %v985 = vadd.f32 %v756, %v960
  %v986 = vadd.f32 %v757, %v963
  %s987 = scalar_lea.vmem %s1, 40
  %v988 = vld [vmem:[%s987] sm:$0xf]
  %v989 = vld [vmem:[%s987 + $0x4] sm:$0xf]
  %v990 = vpack.c.b16 %v582, %v581
  %v991 = vpack.c.b16 %v584, %v583
  %v992 = vpack.c.b16 %v586, %v585
  %v993 = vpack.c.b16 %v588, %v587
  %v994 = vpack.c.b16 %v590, %v589
  %v995 = vpack.c.b16 %v592, %v591
  %v996 = vpack.c.b16 %v594, %v593
  %v997 = vpack.c.b16 %v596, %v595
  %v998 = vpack.c.b16 %v598, %v597
  %v999 = vpack.c.b16 %v600, %v599
  %v1000 = vpack.c.b16 %v763, %v763
  %v1003 = vunpack.c.l.b16 %v988
  %v1004 = vunpack.c.l.b16 %v989
  %v1005 = vpack.c.b16 %v1004, %v1003
  %v1008 = vsel %vm191, %v990, 0
  %v1011 = vsel %vm191, %v991, 0
  %v1014 = vsel %vm191, %v992, 0
  %v1017 = vsel %vm191, %v993, 0
  %v1020 = vsel %vm191, %v994, 0
  %v1023 = vsel %vm191, %v995, 0
  %v1026 = vsel %vm191, %v996, 0
  %v1029 = vsel %vm191, %v997, 0
  %v1032 = vsel %vm191, %v998, 0
  %v1035 = vsel %vm191, %v999, 0
  %v1038 = vsel %vm191, %v1000, 0
  %1040 = vmatpush.bf16.msra.mxu0 0
  %1041 = vmatpush.bf16.msra.mxu0 0
  %1042 = vmatpush.bf16.msra.mxu0 0
  %1043 = vmatpush.bf16.msra.mxu0 0
  %1044 = vmatpush.bf16.msra.mxu0 0
  %1045 = vmatpush.bf16.msra.mxu0 0
  %1046 = vmatpush.bf16.msra.mxu0 0
  %1047 = vmatpush.bf16.msra.mxu0 %v1005
  %1048 = vmatmul.bf16.gmra.mxu0 %v1008
  %v1049 = vpop.f32.mrf.mxu0
  %v1050 = vadd.f32 0.0, %v1049
  %v1051 = vpop.f32.mrf.mxu0
  %v1052 = vadd.f32 0.0, %v1051
  %1053 = vmatmul.bf16.gmra.mxu0 %v1011
  %v1054 = vpop.f32.mrf.mxu0
  %v1055 = vadd.f32 0.0, %v1054
  %v1056 = vpop.f32.mrf.mxu0
  %v1057 = vadd.f32 0.0, %v1056
  %1058 = vmatmul.bf16.gmra.mxu0 %v1014
  %v1059 = vpop.f32.mrf.mxu0
  %v1060 = vadd.f32 0.0, %v1059
  %v1061 = vpop.f32.mrf.mxu0
  %v1062 = vadd.f32 0.0, %v1061
  %1063 = vmatmul.bf16.gmra.mxu0 %v1017
  %v1064 = vpop.f32.mrf.mxu0
  %v1065 = vadd.f32 0.0, %v1064
  %v1066 = vpop.f32.mrf.mxu0
  %v1067 = vadd.f32 0.0, %v1066
  %1068 = vmatmul.bf16.gmra.mxu0 %v1020
  %v1069 = vpop.f32.mrf.mxu0
  %v1070 = vadd.f32 0.0, %v1069
  %v1071 = vpop.f32.mrf.mxu0
  %v1072 = vadd.f32 0.0, %v1071
  %1073 = vmatmul.bf16.gmra.mxu0 %v1023
  %v1074 = vpop.f32.mrf.mxu0
  %v1075 = vadd.f32 0.0, %v1074
  %v1076 = vpop.f32.mrf.mxu0
  %v1077 = vadd.f32 0.0, %v1076
  %1078 = vmatmul.bf16.gmra.mxu0 %v1026
  %v1079 = vpop.f32.mrf.mxu0
  %v1080 = vadd.f32 0.0, %v1079
  %v1081 = vpop.f32.mrf.mxu0
  %v1082 = vadd.f32 0.0, %v1081
  %1083 = vmatmul.bf16.gmra.mxu0 %v1029
  %v1084 = vpop.f32.mrf.mxu0
  %v1085 = vadd.f32 0.0, %v1084
  %v1086 = vpop.f32.mrf.mxu0
  %v1087 = vadd.f32 0.0, %v1086
  %1088 = vmatmul.bf16.gmra.mxu0 %v1032
  %v1089 = vpop.f32.mrf.mxu0
  %v1090 = vadd.f32 0.0, %v1089
  %v1091 = vpop.f32.mrf.mxu0
  %v1092 = vadd.f32 0.0, %v1091
  %1093 = vmatmul.bf16.gmra.mxu0 %v1035
  %v1094 = vpop.f32.mrf.mxu0
  %v1095 = vadd.f32 0.0, %v1094
  %v1096 = vpop.f32.mrf.mxu0
  %v1097 = vadd.f32 0.0, %v1096
  %1098 = vmatmul.bf16.gmra.mxu0 %v1038
  %v1099 = vpop.f32.mrf.mxu0
  %v1100 = vadd.f32 0.0, %v1099
  %v1101 = vpop.f32.mrf.mxu0
  %1102 = vdwg.mxu0
  %v1103 = vadd.f32 %v966, %v1050
  %v1104 = vadd.f32 %v967, %v1052
  %v1105 = vadd.f32 %v968, %v1055
  %v1106 = vadd.f32 %v969, %v1057
  %v1107 = vadd.f32 %v970, %v1060
  %v1108 = vadd.f32 %v971, %v1062
  %v1109 = vadd.f32 %v972, %v1065
  %v1110 = vadd.f32 %v973, %v1067
  %v1111 = vadd.f32 %v974, %v1070
  %v1112 = vadd.f32 %v975, %v1072
  %v1113 = vadd.f32 %v976, %v1075
  %v1114 = vadd.f32 %v977, %v1077
  %v1115 = vadd.f32 %v978, %v1080
  %v1116 = vadd.f32 %v979, %v1082
  %v1117 = vadd.f32 %v980, %v1085
  %v1118 = vadd.f32 %v981, %v1087
  %v1119 = vadd.f32 %v982, %v1090
  %v1120 = vadd.f32 %v983, %v1092
  %v1121 = vadd.f32 %v984, %v1095
  %v1122 = vadd.f32 %v985, %v1097
  %v1123 = vadd.f32 %v986, %v1100
  %v1124 = vld [vmem:[%s0 + $0xc] sm:$0xc]
  %v1125 = vld [vmem:[%s0 + $0x10] sm:$0xf]
  %v1126 = vld [vmem:[%s0 + $0x14] sm:$0xf]
  %v1127 = vld [vmem:[%s0 + $0x18] sm:$0xf]
  %v1128 = vld [vmem:[%s0 + $0x1c] sm:$0xf]
  %v1129 = vld [vmem:[%s0 + $0x20] sm:$0xf]
  %v1130 = vld [vmem:[%s0 + $0x24] sm:$0xf]
  %v1131 = vld [vmem:[%s0 + $0x28] sm:$0xf]
  %v1132 = vld [vmem:[%s0 + $0x2c] sm:$0xf]
  %v1133 = vld [vmem:[%s0 + $0x30] sm:$0xf]
  %v1134 = vld [vmem:[%s0 + $0x34] sm:$0xf]
  %v1135 = vld [vmem:[%s0 + $0x38] sm:$0xf]
  %v1136 = vld [vmem:[%s0 + $0x3c] sm:$0xf]
  %v1137 = vld [vmem:[%s0 + $0x40] sm:$0xf]
  %v1138 = vld [vmem:[%s0 + $0x44] sm:$0xf]
  %v1139 = vld [vmem:[%s0 + $0x48] sm:$0xf]
  %v1140 = vld [vmem:[%s0 + $0x4c] sm:$0xf]
  %v1141 = vld [vmem:[%s0 + $0x50] sm:$0xf]
  %v1142 = vld [vmem:[%s0 + $0x54] sm:$0xf]
  %v1143 = vld [vmem:[%s0 + $0x58] sm:$0xf]
  %v1144 = vld [vmem:[%s0 + $0x5c] sm:$0xf]
  %v1145 = vld [vmem:[%s0 + $0x60] sm:$0x3]
  %s1146 = scalar_lea.vmem %s1, 48
  %v1147 = vld [vmem:[%s1146] sm:$0xf]
  %v1148 = vld [vmem:[%s1146 + $0x4] sm:$0xf]
  %v1171 = vunpack.c.l.b16 %v1124
  %v1172 = vunpack.c.l.b16 %v1125
  %v1173 = vunpack.c.l.b16 %v1126
  %v1174 = vunpack.c.l.b16 %v1127
  %v1175 = vunpack.c.l.b16 %v1128
  %v1176 = vunpack.c.l.b16 %v1129
  %v1177 = vunpack.c.l.b16 %v1130
  %v1178 = vunpack.c.l.b16 %v1131
  %v1179 = vunpack.c.l.b16 %v1132
  %v1180 = vunpack.c.l.b16 %v1133
  %v1181 = vunpack.c.l.b16 %v1134
  %v1182 = vunpack.c.l.b16 %v1135
  %v1183 = vunpack.c.l.b16 %v1136
  %v1184 = vunpack.c.l.b16 %v1137
  %v1185 = vunpack.c.l.b16 %v1138
  %v1186 = vunpack.c.l.b16 %v1139
  %v1187 = vunpack.c.l.b16 %v1140
  %v1188 = vunpack.c.l.b16 %v1141
  %v1189 = vunpack.c.l.b16 %v1142
  %v1190 = vunpack.c.l.b16 %v1143
  %v1191 = vunpack.c.l.b16 %v1144
  %v1192 = vunpack.c.l.b16 %v1145
  %v1193 = vpack.c.b16 %v1172, %v1171
  %v1194 = vpack.c.b16 %v1174, %v1173
  %v1195 = vpack.c.b16 %v1176, %v1175
  %v1196 = vpack.c.b16 %v1178, %v1177
  %v1197 = vpack.c.b16 %v1180, %v1179
  %v1198 = vpack.c.b16 %v1182, %v1181
  %v1199 = vpack.c.b16 %v1184, %v1183
  %v1200 = vpack.c.b16 %v1186, %v1185
  %v1201 = vpack.c.b16 %v1188, %v1187
  %v1202 = vpack.c.b16 %v1190, %v1189
  %v1203 = vpack.c.b16 %v1192, %v1191
  %vm1204 = vcmask 1045504
  %v1205 = vrot.slane %v1193, 2
  %v1206 = vrot.slane %v1194, 2
  %v1207 = vsel %vm1204, %v1205, %v1206
  %v1208 = vrot.slane %v1195, 2
  %v1209 = vsel %vm1204, %v1206, %v1208
  %v1210 = vrot.slane %v1196, 2
  %v1211 = vsel %vm1204, %v1208, %v1210
  %v1212 = vrot.slane %v1197, 2
  %v1213 = vsel %vm1204, %v1210, %v1212
  %v1214 = vrot.slane %v1198, 2
  %v1215 = vsel %vm1204, %v1212, %v1214
  %v1216 = vrot.slane %v1199, 2
  %v1217 = vsel %vm1204, %v1214, %v1216
  %v1218 = vrot.slane %v1200, 2
  %v1219 = vsel %vm1204, %v1216, %v1218
  %v1220 = vrot.slane %v1201, 2
  %v1221 = vsel %vm1204, %v1218, %v1220
  %v1222 = vrot.slane %v1202, 2
  %v1223 = vsel %vm1204, %v1220, %v1222
  %v1224 = vrot.slane %v1203, 2
  %v1225 = vsel %vm1204, %v1222, %v1224
  %v1228 = vunpack.c.l.b16 %v1147
  %v1229 = vunpack.c.l.b16 %v1148
  %v1230 = vpack.c.b16 %v1229, %v1228
  %v1233 = vsel %vm191, %v1207, 0
  %v1236 = vsel %vm191, %v1209, 0
  %v1239 = vsel %vm191, %v1211, 0
  %v1242 = vsel %vm191, %v1213, 0
  %v1245 = vsel %vm191, %v1215, 0
  %v1248 = vsel %vm191, %v1217, 0
  %v1251 = vsel %vm191, %v1219, 0
  %v1254 = vsel %vm191, %v1221, 0
  %v1257 = vsel %vm191, %v1223, 0
  %v1260 = vsel %vm191, %v1225, 0
  %v1263 = vsel %vm191, %v1224, 0
  %1265 = vmatpush.bf16.msra.mxu0 0
  %1266 = vmatpush.bf16.msra.mxu0 0
  %1267 = vmatpush.bf16.msra.mxu0 0
  %1268 = vmatpush.bf16.msra.mxu0 0
  %1269 = vmatpush.bf16.msra.mxu0 0
  %1270 = vmatpush.bf16.msra.mxu0 0
  %1271 = vmatpush.bf16.msra.mxu0 0
  %1272 = vmatpush.bf16.msra.mxu0 %v1230
  %1273 = vmatmul.bf16.gmra.mxu0 %v1233
  %v1274 = vpop.f32.mrf.mxu0
  %v1275 = vadd.f32 0.0, %v1274
  %v1276 = vpop.f32.mrf.mxu0
  %v1277 = vadd.f32 0.0, %v1276
  %1278 = vmatmul.bf16.gmra.mxu0 %v1236
  %v1279 = vpop.f32.mrf.mxu0
  %v1280 = vadd.f32 0.0, %v1279
  %v1281 = vpop.f32.mrf.mxu0
  %v1282 = vadd.f32 0.0, %v1281
  %1283 = vmatmul.bf16.gmra.mxu0 %v1239
  %v1284 = vpop.f32.mrf.mxu0
  %v1285 = vadd.f32 0.0, %v1284
  %v1286 = vpop.f32.mrf.mxu0
  %v1287 = vadd.f32 0.0, %v1286
  %1288 = vmatmul.bf16.gmra.mxu0 %v1242
  %v1289 = vpop.f32.mrf.mxu0
  %v1290 = vadd.f32 0.0, %v1289
  %v1291 = vpop.f32.mrf.mxu0
  %v1292 = vadd.f32 0.0, %v1291
  %1293 = vmatmul.bf16.gmra.mxu0 %v1245
  %v1294 = vpop.f32.mrf.mxu0
  %v1295 = vadd.f32 0.0, %v1294
  %v1296 = vpop.f32.mrf.mxu0
  %v1297 = vadd.f32 0.0, %v1296
  %1298 = vmatmul.bf16.gmra.mxu0 %v1248
  %v1299 = vpop.f32.mrf.mxu0
  %v1300 = vadd.f32 0.0, %v1299
  %v1301 = vpop.f32.mrf.mxu0
  %v1302 = vadd.f32 0.0, %v1301
  %1303 = vmatmul.bf16.gmra.mxu0 %v1251
  %v1304 = vpop.f32.mrf.mxu0
  %v1305 = vadd.f32 0.0, %v1304
  %v1306 = vpop.f32.mrf.mxu0
  %v1307 = vadd.f32 0.0, %v1306
  %1308 = vmatmul.bf16.gmra.mxu0 %v1254
  %v1309 = vpop.f32.mrf.mxu0
  %v1310 = vadd.f32 0.0, %v1309
  %v1311 = vpop.f32.mrf.mxu0
  %v1312 = vadd.f32 0.0, %v1311
  %1313 = vmatmul.bf16.gmra.mxu0 %v1257
  %v1314 = vpop.f32.mrf.mxu0
  %v1315 = vadd.f32 0.0, %v1314
  %v1316 = vpop.f32.mrf.mxu0
  %v1317 = vadd.f32 0.0, %v1316
  %1318 = vmatmul.bf16.gmra.mxu0 %v1260
  %v1319 = vpop.f32.mrf.mxu0
  %v1320 = vadd.f32 0.0, %v1319
  %v1321 = vpop.f32.mrf.mxu0
  %v1322 = vadd.f32 0.0, %v1321
  %1323 = vmatmul.bf16.gmra.mxu0 %v1263
  %v1324 = vpop.f32.mrf.mxu0
  %v1325 = vadd.f32 0.0, %v1324
  %v1326 = vpop.f32.mrf.mxu0
  %1327 = vdwg.mxu0
  %v1328 = vadd.f32 %v1103, %v1275
  %v1329 = vadd.f32 %v1104, %v1277
  %v1330 = vadd.f32 %v1105, %v1280
  %v1331 = vadd.f32 %v1106, %v1282
  %v1332 = vadd.f32 %v1107, %v1285
  %v1333 = vadd.f32 %v1108, %v1287
  %v1334 = vadd.f32 %v1109, %v1290
  %v1335 = vadd.f32 %v1110, %v1292
  %v1336 = vadd.f32 %v1111, %v1295
  %v1337 = vadd.f32 %v1112, %v1297
  %v1338 = vadd.f32 %v1113, %v1300
  %v1339 = vadd.f32 %v1114, %v1302
  %v1340 = vadd.f32 %v1115, %v1305
  %v1341 = vadd.f32 %v1116, %v1307
  %v1342 = vadd.f32 %v1117, %v1310
  %v1343 = vadd.f32 %v1118, %v1312
  %v1344 = vadd.f32 %v1119, %v1315
  %v1345 = vadd.f32 %v1120, %v1317
  %v1346 = vadd.f32 %v1121, %v1320
  %v1347 = vadd.f32 %v1122, %v1322
  %v1348 = vadd.f32 %v1123, %v1325
  %v1349 = vld [vmem:[%s0 + $0x60] sm:$0x7]
  %s1350 = scalar_lea.vmem %s1, 56
  %v1351 = vld [vmem:[%s1350] sm:$0xf]
  %v1352 = vld [vmem:[%s1350 + $0x4] sm:$0xf]
  %v1354 = vunpack.c.l.b16 %v1349
  %v1355 = vpack.c.b16 %v1354, %v1191
  %vm1356 = vsmask.f32 5376
  %v1358 = vshrl.u32 %v1193, 16
  %v1360 = vrot.slane %v1358, 2
  %v1361 = vshll.u32 %v1193, 16
  %v1363 = vrot.slane %v1361, 3
  %v1364 = vor.u32 %v1360, %v1363
  %v1366 = vshrl.u32 %v1194, 16
  %v1368 = vrot.slane %v1366, 2
  %v1369 = vshll.u32 %v1194, 16
  %v1371 = vrot.slane %v1369, 3
  %v1372 = vor.u32 %v1368, %v1371
  %v1373 = vsel %vm1356, %v1364, %v1372
  %v1375 = vshrl.u32 %v1195, 16
  %v1377 = vrot.slane %v1375, 2
  %v1378 = vshll.u32 %v1195, 16
  %v1380 = vrot.slane %v1378, 3
  %v1381 = vor.u32 %v1377, %v1380
  %v1382 = vsel %vm1356, %v1372, %v1381
  %v1384 = vshrl.u32 %v1196, 16
  %v1386 = vrot.slane %v1384, 2
  %v1387 = vshll.u32 %v1196, 16
  %v1389 = vrot.slane %v1387, 3
  %v1390 = vor.u32 %v1386, %v1389
  %v1391 = vsel %vm1356, %v1381, %v1390
  %v1393 = vshrl.u32 %v1197, 16
  %v1395 = vrot.slane %v1393, 2
  %v1396 = vshll.u32 %v1197, 16
  %v1398 = vrot.slane %v1396, 3
  %v1399 = vor.u32 %v1395, %v1398
  %v1400 = vsel %vm1356, %v1390, %v1399
  %v1402 = vshrl.u32 %v1198, 16
  %v1404 = vrot.slane %v1402, 2
  %v1405 = vshll.u32 %v1198, 16
  %v1407 = vrot.slane %v1405, 3
  %v1408 = vor.u32 %v1404, %v1407
  %v1409 = vsel %vm1356, %v1399, %v1408
  %v1411 = vshrl.u32 %v1199, 16
  %v1413 = vrot.slane %v1411, 2
  %v1414 = vshll.u32 %v1199, 16
  %v1416 = vrot.slane %v1414, 3
  %v1417 = vor.u32 %v1413, %v1416
  %v1418 = vsel %vm1356, %v1408, %v1417
  %v1420 = vshrl.u32 %v1200, 16
  %v1422 = vrot.slane %v1420, 2
  %v1423 = vshll.u32 %v1200, 16
  %v1425 = vrot.slane %v1423, 3
  %v1426 = vor.u32 %v1422, %v1425
  %v1427 = vsel %vm1356, %v1417, %v1426
  %v1429 = vshrl.u32 %v1201, 16
  %v1431 = vrot.slane %v1429, 2
  %v1432 = vshll.u32 %v1201, 16
  %v1434 = vrot.slane %v1432, 3
  %v1435 = vor.u32 %v1431, %v1434
  %v1436 = vsel %vm1356, %v1426, %v1435
  %v1438 = vshrl.u32 %v1202, 16
  %v1440 = vrot.slane %v1438, 2
  %v1441 = vshll.u32 %v1202, 16
  %v1443 = vrot.slane %v1441, 3
  %v1444 = vor.u32 %v1440, %v1443
  %v1445 = vsel %vm1356, %v1435, %v1444
  %v1447 = vshrl.u32 %v1355, 16
  %v1449 = vrot.slane %v1447, 2
  %v1450 = vshll.u32 %v1355, 16
  %v1452 = vrot.slane %v1450, 3
  %v1453 = vor.u32 %v1449, %v1452
  %v1454 = vsel %vm1356, %v1444, %v1453
  %v1457 = vunpack.c.l.b16 %v1351
  %v1458 = vunpack.c.l.b16 %v1352
  %v1459 = vpack.c.b16 %v1458, %v1457
  %v1462 = vsel %vm191, %v1373, 0
  %v1465 = vsel %vm191, %v1382, 0
  %v1468 = vsel %vm191, %v1391, 0
  %v1471 = vsel %vm191, %v1400, 0
  %v1474 = vsel %vm191, %v1409, 0
  %v1477 = vsel %vm191, %v1418, 0
  %v1480 = vsel %vm191, %v1427, 0
  %v1483 = vsel %vm191, %v1436, 0
  %v1486 = vsel %vm191, %v1445, 0
  %v1489 = vsel %vm191, %v1454, 0
  %v1492 = vsel %vm191, %v1453, 0
  %1494 = vmatpush.bf16.msra.mxu0 0
  %1495 = vmatpush.bf16.msra.mxu0 0
  %1496 = vmatpush.bf16.msra.mxu0 0
  %1497 = vmatpush.bf16.msra.mxu0 0
  %1498 = vmatpush.bf16.msra.mxu0 0
  %1499 = vmatpush.bf16.msra.mxu0 0
  %1500 = vmatpush.bf16.msra.mxu0 0
  %1501 = vmatpush.bf16.msra.mxu0 %v1459
  %1502 = vmatmul.bf16.gmra.mxu0 %v1462
  %v1503 = vpop.f32.mrf.mxu0
  %v1504 = vadd.f32 0.0, %v1503
  %v1505 = vpop.f32.mrf.mxu0
  %v1506 = vadd.f32 0.0, %v1505
  %1507 = vmatmul.bf16.gmra.mxu0 %v1465
  %v1508 = vpop.f32.mrf.mxu0
  %v1509 = vadd.f32 0.0, %v1508
  %v1510 = vpop.f32.mrf.mxu0
  %v1511 = vadd.f32 0.0, %v1510
  %1512 = vmatmul.bf16.gmra.mxu0 %v1468
  %v1513 = vpop.f32.mrf.mxu0
  %v1514 = vadd.f32 0.0, %v1513
  %v1515 = vpop.f32.mrf.mxu0
  %v1516 = vadd.f32 0.0, %v1515
  %1517 = vmatmul.bf16.gmra.mxu0 %v1471
  %v1518 = vpop.f32.mrf.mxu0
  %v1519 = vadd.f32 0.0, %v1518
  %v1520 = vpop.f32.mrf.mxu0
  %v1521 = vadd.f32 0.0, %v1520
  %1522 = vmatmul.bf16.gmra.mxu0 %v1474
  %v1523 = vpop.f32.mrf.mxu0
  %v1524 = vadd.f32 0.0, %v1523
  %v1525 = vpop.f32.mrf.mxu0
  %v1526 = vadd.f32 0.0, %v1525
  %1527 = vmatmul.bf16.gmra.mxu0 %v1477
  %v1528 = vpop.f32.mrf.mxu0
  %v1529 = vadd.f32 0.0, %v1528
  %v1530 = vpop.f32.mrf.mxu0
  %v1531 = vadd.f32 0.0, %v1530
  %1532 = vmatmul.bf16.gmra.mxu0 %v1480
  %v1533 = vpop.f32.mrf.mxu0
  %v1534 = vadd.f32 0.0, %v1533
  %v1535 = vpop.f32.mrf.mxu0
  %v1536 = vadd.f32 0.0, %v1535
  %1537 = vmatmul.bf16.gmra.mxu0 %v1483
  %v1538 = vpop.f32.mrf.mxu0
  %v1539 = vadd.f32 0.0, %v1538
  %v1540 = vpop.f32.mrf.mxu0
  %v1541 = vadd.f32 0.0, %v1540
  %1542 = vmatmul.bf16.gmra.mxu0 %v1486
  %v1543 = vpop.f32.mrf.mxu0
  %v1544 = vadd.f32 0.0, %v1543
  %v1545 = vpop.f32.mrf.mxu0
  %v1546 = vadd.f32 0.0, %v1545
  %1547 = vmatmul.bf16.gmra.mxu0 %v1489
  %v1548 = vpop.f32.mrf.mxu0
  %v1549 = vadd.f32 0.0, %v1548
  %v1550 = vpop.f32.mrf.mxu0
  %v1551 = vadd.f32 0.0, %v1550
  %1552 = vmatmul.bf16.gmra.mxu0 %v1492
  %v1553 = vpop.f32.mrf.mxu0
  %v1554 = vadd.f32 0.0, %v1553
  %v1555 = vpop.f32.mrf.mxu0
  %1556 = vdwg.mxu0
  %v1557 = vadd.f32 %v1328, %v1504
  %v1558 = vadd.f32 %v1329, %v1506
  %v1559 = vadd.f32 %v1330, %v1509
  %v1560 = vadd.f32 %v1331, %v1511
  %v1561 = vadd.f32 %v1332, %v1514
  %v1562 = vadd.f32 %v1333, %v1516
  %v1563 = vadd.f32 %v1334, %v1519
  %v1564 = vadd.f32 %v1335, %v1521
  %v1565 = vadd.f32 %v1336, %v1524
  %v1566 = vadd.f32 %v1337, %v1526
  %v1567 = vadd.f32 %v1338, %v1529
  %v1568 = vadd.f32 %v1339, %v1531
  %v1569 = vadd.f32 %v1340, %v1534
  %v1570 = vadd.f32 %v1341, %v1536
  %v1571 = vadd.f32 %v1342, %v1539
  %v1572 = vadd.f32 %v1343, %v1541
  %v1573 = vadd.f32 %v1344, %v1544
  %v1574 = vadd.f32 %v1345, %v1546
  %v1575 = vadd.f32 %v1346, %v1549
  %v1576 = vadd.f32 %v1347, %v1551
  %v1577 = vadd.f32 %v1348, %v1554
  %v1578 = vld [vmem:[%s0 + $0xc] sm:$0x8]
  %s1579 = scalar_lea.vmem %s1, 64
  %v1580 = vld [vmem:[%s1579] sm:$0xf]
  %v1581 = vld [vmem:[%s1579 + $0x4] sm:$0xf]
  %v1583 = vunpack.c.l.b16 %v1578
  %v1584 = vpack.c.b16 %v1172, %v1583
  %v1585 = vrot.slane %v1584, 3
  %v1586 = vrot.slane %v1194, 3
  %v1587 = vsel %vm613, %v1585, %v1586
  %v1588 = vrot.slane %v1195, 3
  %v1589 = vsel %vm613, %v1586, %v1588
  %v1590 = vrot.slane %v1196, 3
  %v1591 = vsel %vm613, %v1588, %v1590
  %v1592 = vrot.slane %v1197, 3
  %v1593 = vsel %vm613, %v1590, %v1592
  %v1594 = vrot.slane %v1198, 3
  %v1595 = vsel %vm613, %v1592, %v1594
  %v1596 = vrot.slane %v1199, 3
  %v1597 = vsel %vm613, %v1594, %v1596
  %v1598 = vrot.slane %v1200, 3
  %v1599 = vsel %vm613, %v1596, %v1598
  %v1600 = vrot.slane %v1201, 3
  %v1601 = vsel %vm613, %v1598, %v1600
  %v1602 = vrot.slane %v1202, 3
  %v1603 = vsel %vm613, %v1600, %v1602
  %v1604 = vrot.slane %v1355, 3
  %v1605 = vsel %vm613, %v1602, %v1604
  %v1608 = vunpack.c.l.b16 %v1580
  %v1609 = vunpack.c.l.b16 %v1581
  %v1610 = vpack.c.b16 %v1609, %v1608
  %v1613 = vsel %vm191, %v1587, 0
  %v1616 = vsel %vm191, %v1589, 0
  %v1619 = vsel %vm191, %v1591, 0
  %v1622 = vsel %vm191, %v1593, 0
  %v1625 = vsel %vm191, %v1595, 0
  %v1628 = vsel %vm191, %v1597, 0
  %v1631 = vsel %vm191, %v1599, 0
  %v1634 = vsel %vm191, %v1601, 0
  %v1637 = vsel %vm191, %v1603, 0
  %v1640 = vsel %vm191, %v1605, 0
  %v1643 = vsel %vm191, %v1604, 0
  %1645 = vmatpush.bf16.msra.mxu0 0
  %1646 = vmatpush.bf16.msra.mxu0 0
  %1647 = vmatpush.bf16.msra.mxu0 0
  %1648 = vmatpush.bf16.msra.mxu0 0
  %1649 = vmatpush.bf16.msra.mxu0 0
  %1650 = vmatpush.bf16.msra.mxu0 0
  %1651 = vmatpush.bf16.msra.mxu0 0
  %1652 = vmatpush.bf16.msra.mxu0 %v1610
  %1653 = vmatmul.bf16.gmra.mxu0 %v1613
  %v1654 = vpop.f32.mrf.mxu0
  %v1655 = vadd.f32 0.0, %v1654
  %v1656 = vpop.f32.mrf.mxu0
  %v1657 = vadd.f32 0.0, %v1656
  %1658 = vmatmul.bf16.gmra.mxu0 %v1616
  %v1659 = vpop.f32.mrf.mxu0
  %v1660 = vadd.f32 0.0, %v1659
  %v1661 = vpop.f32.mrf.mxu0
  %v1662 = vadd.f32 0.0, %v1661
  %1663 = vmatmul.bf16.gmra.mxu0 %v1619
  %v1664 = vpop.f32.mrf.mxu0
  %v1665 = vadd.f32 0.0, %v1664
  %v1666 = vpop.f32.mrf.mxu0
  %v1667 = vadd.f32 0.0, %v1666
  %1668 = vmatmul.bf16.gmra.mxu0 %v1622
  %v1669 = vpop.f32.mrf.mxu0
  %v1670 = vadd.f32 0.0, %v1669
  %v1671 = vpop.f32.mrf.mxu0
  %v1672 = vadd.f32 0.0, %v1671
  %1673 = vmatmul.bf16.gmra.mxu0 %v1625
  %v1674 = vpop.f32.mrf.mxu0
  %v1675 = vadd.f32 0.0, %v1674
  %v1676 = vpop.f32.mrf.mxu0
  %v1677 = vadd.f32 0.0, %v1676
  %1678 = vmatmul.bf16.gmra.mxu0 %v1628
  %v1679 = vpop.f32.mrf.mxu0
  %v1680 = vadd.f32 0.0, %v1679
  %v1681 = vpop.f32.mrf.mxu0
  %v1682 = vadd.f32 0.0, %v1681
  %1683 = vmatmul.bf16.gmra.mxu0 %v1631
  %v1684 = vpop.f32.mrf.mxu0
  %v1685 = vadd.f32 0.0, %v1684
  %v1686 = vpop.f32.mrf.mxu0
  %v1687 = vadd.f32 0.0, %v1686
  %1688 = vmatmul.bf16.gmra.mxu0 %v1634
  %v1689 = vpop.f32.mrf.mxu0
  %v1690 = vadd.f32 0.0, %v1689
  %v1691 = vpop.f32.mrf.mxu0
  %v1692 = vadd.f32 0.0, %v1691
  %1693 = vmatmul.bf16.gmra.mxu0 %v1637
  %v1694 = vpop.f32.mrf.mxu0
  %v1695 = vadd.f32 0.0, %v1694
  %v1696 = vpop.f32.mrf.mxu0
  %v1697 = vadd.f32 0.0, %v1696
  %1698 = vmatmul.bf16.gmra.mxu0 %v1640
  %v1699 = vpop.f32.mrf.mxu0
  %v1700 = vadd.f32 0.0, %v1699
  %v1701 = vpop.f32.mrf.mxu0
  %v1702 = vadd.f32 0.0, %v1701
  %1703 = vmatmul.bf16.gmra.mxu0 %v1643
  %v1704 = vpop.f32.mrf.mxu0
  %v1705 = vadd.f32 0.0, %v1704
  %v1706 = vpop.f32.mrf.mxu0
  %1707 = vdwg.mxu0
  %v1708 = vadd.f32 %v1557, %v1655
  %v1709 = vadd.f32 %v1558, %v1657
  %v1710 = vadd.f32 %v1559, %v1660
  %v1711 = vadd.f32 %v1560, %v1662
  %v1712 = vadd.f32 %v1561, %v1665
  %v1713 = vadd.f32 %v1562, %v1667
  %v1714 = vadd.f32 %v1563, %v1670
  %v1715 = vadd.f32 %v1564, %v1672
  %v1716 = vadd.f32 %v1565, %v1675
  %v1717 = vadd.f32 %v1566, %v1677
  %v1718 = vadd.f32 %v1567, %v1680
  %v1719 = vadd.f32 %v1568, %v1682
  %v1720 = vadd.f32 %v1569, %v1685
  %v1721 = vadd.f32 %v1570, %v1687
  %v1722 = vadd.f32 %v1571, %v1690
  %v1723 = vadd.f32 %v1572, %v1692
  %v1724 = vadd.f32 %v1573, %v1695
  %v1725 = vadd.f32 %v1574, %v1697
  %v1726 = vadd.f32 %v1575, %v1700
  %v1727 = vadd.f32 %v1576, %v1702
  %v1728 = vadd.f32 %v1577, %v1705
  %v1729 = vld [vmem:[%s2] sm:$0x1]
  %v1731 = vperm.slane %v1729, 0
  %v1733 = vadd.f32 %v1708, %v1731
  %v1734 = vadd.f32 %v1709, %v1731
  %v1735 = vadd.f32 %v1710, %v1731
  %v1736 = vadd.f32 %v1711, %v1731
  %v1737 = vadd.f32 %v1712, %v1731
  %v1738 = vadd.f32 %v1713, %v1731
  %v1739 = vadd.f32 %v1714, %v1731
  %v1740 = vadd.f32 %v1715, %v1731
  %v1741 = vadd.f32 %v1716, %v1731
  %v1742 = vadd.f32 %v1717, %v1731
  %v1743 = vadd.f32 %v1718, %v1731
  %v1744 = vadd.f32 %v1719, %v1731
  %v1745 = vadd.f32 %v1720, %v1731
  %v1746 = vadd.f32 %v1721, %v1731
  %v1747 = vadd.f32 %v1722, %v1731
  %v1748 = vadd.f32 %v1723, %v1731
  %v1749 = vadd.f32 %v1724, %v1731
  %v1750 = vadd.f32 %v1725, %v1731
  %v1751 = vadd.f32 %v1726, %v1731
  %v1752 = vadd.f32 %v1727, %v1731
  %v1753 = vadd.f32 %v1728, %v1731
  %vm1754 = vcmp.gt.f32.partialorder %v1733, 0.0
  %vm1755 = vcmp.gt.f32.partialorder %v1734, 0.0
  %vm1756 = vcmp.gt.f32.partialorder %v1735, 0.0
  %vm1757 = vcmp.gt.f32.partialorder %v1736, 0.0
  %vm1758 = vcmp.gt.f32.partialorder %v1737, 0.0
  %vm1759 = vcmp.gt.f32.partialorder %v1738, 0.0
  %vm1760 = vcmp.gt.f32.partialorder %v1739, 0.0
  %vm1761 = vcmp.gt.f32.partialorder %v1740, 0.0
  %vm1762 = vcmp.gt.f32.partialorder %v1741, 0.0
  %vm1763 = vcmp.gt.f32.partialorder %v1742, 0.0
  %vm1764 = vcmp.gt.f32.partialorder %v1743, 0.0
  %vm1765 = vcmp.gt.f32.partialorder %v1744, 0.0
  %vm1766 = vcmp.gt.f32.partialorder %v1745, 0.0
  %vm1767 = vcmp.gt.f32.partialorder %v1746, 0.0
  %vm1768 = vcmp.gt.f32.partialorder %v1747, 0.0
  %vm1769 = vcmp.gt.f32.partialorder %v1748, 0.0
  %vm1770 = vcmp.gt.f32.partialorder %v1749, 0.0
  %vm1771 = vcmp.gt.f32.partialorder %v1750, 0.0
  %vm1772 = vcmp.gt.f32.partialorder %v1751, 0.0
  %vm1773 = vcmp.gt.f32.partialorder %v1752, 0.0
  %vm1774 = vcmp.gt.f32.partialorder %v1753, 0.0
  %v1775 = vmul.f32 %v1733, 0.2
  %v1776 = vmul.f32 %v1734, 0.2
  %v1777 = vmul.f32 %v1735, 0.2
  %v1778 = vmul.f32 %v1736, 0.2
  %v1779 = vmul.f32 %v1737, 0.2
  %v1780 = vmul.f32 %v1738, 0.2
  %v1781 = vmul.f32 %v1739, 0.2
  %v1782 = vmul.f32 %v1740, 0.2
  %v1783 = vmul.f32 %v1741, 0.2
  %v1784 = vmul.f32 %v1742, 0.2
  %v1785 = vmul.f32 %v1743, 0.2
  %v1786 = vmul.f32 %v1744, 0.2
  %v1787 = vmul.f32 %v1745, 0.2
  %v1788 = vmul.f32 %v1746, 0.2
  %v1789 = vmul.f32 %v1747, 0.2
  %v1790 = vmul.f32 %v1748, 0.2
  %v1791 = vmul.f32 %v1749, 0.2
  %v1792 = vmul.f32 %v1750, 0.2
  %v1793 = vmul.f32 %v1751, 0.2
  %v1794 = vmul.f32 %v1752, 0.2
  %v1795 = vmul.f32 %v1753, 0.2
  %v1796 = vsel %vm1754, %v1733, %v1775
  %v1797 = vsel %vm1755, %v1734, %v1776
  %v1798 = vsel %vm1756, %v1735, %v1777
  %v1799 = vsel %vm1757, %v1736, %v1778
  %v1800 = vsel %vm1758, %v1737, %v1779
  %v1801 = vsel %vm1759, %v1738, %v1780
  %v1802 = vsel %vm1760, %v1739, %v1781
  %v1803 = vsel %vm1761, %v1740, %v1782
  %v1804 = vsel %vm1762, %v1741, %v1783
  %v1805 = vsel %vm1763, %v1742, %v1784
  %v1806 = vsel %vm1764, %v1743, %v1785
  %v1807 = vsel %vm1765, %v1744, %v1786
  %v1808 = vsel %vm1766, %v1745, %v1787
  %v1809 = vsel %vm1767, %v1746, %v1788
  %v1810 = vsel %vm1768, %v1747, %v1789
  %v1811 = vsel %vm1769, %v1748, %v1790
  %v1812 = vsel %vm1770, %v1749, %v1791
  %v1813 = vsel %vm1771, %v1750, %v1792
  %v1814 = vsel %vm1772, %v1751, %v1793
  %v1815 = vsel %vm1773, %v1752, %v1794
  %v1816 = vsel %vm1774, %v1753, %v1795
  %v1817 = vpack.c.bf16 %v1796, %v1796
  %v1818 = vpack.c.bf16 %v1797, %v1797
  %v1819 = vpack.c.bf16 %v1798, %v1798
  %v1820 = vpack.c.bf16 %v1799, %v1799
  %v1821 = vpack.c.bf16 %v1800, %v1800
  %v1822 = vpack.c.bf16 %v1801, %v1801
  %v1823 = vpack.c.bf16 %v1802, %v1802
  %v1824 = vpack.c.bf16 %v1803, %v1803
  %v1825 = vpack.c.bf16 %v1804, %v1804
  %v1826 = vpack.c.bf16 %v1805, %v1805
  %v1827 = vpack.c.bf16 %v1806, %v1806
  %v1828 = vpack.c.bf16 %v1807, %v1807
  %v1829 = vpack.c.bf16 %v1808, %v1808
  %v1830 = vpack.c.bf16 %v1809, %v1809
  %v1831 = vpack.c.bf16 %v1810, %v1810
  %v1832 = vpack.c.bf16 %v1811, %v1811
  %v1833 = vpack.c.bf16 %v1812, %v1812
  %v1834 = vpack.c.bf16 %v1813, %v1813
  %v1835 = vpack.c.bf16 %v1814, %v1814
  %v1836 = vpack.c.bf16 %v1815, %v1815
  %v1837 = vpack.c.bf16 %v1816, %v1816
  %vm1838 = vcmask 257024
  %1839 = vst.msk [vmem:[%s3] sm:$0xf] %vm1838, %v1817
  %1840 = vst.msk [vmem:[%s3 + $0x4] sm:$0xf] %vm1838, %v1818
  %1841 = vst.msk [vmem:[%s3 + $0x8] sm:$0xf] %vm1838, %v1819
  %1842 = vst.msk [vmem:[%s3 + $0xc] sm:$0xf] %vm1838, %v1820
  %1843 = vst.msk [vmem:[%s3 + $0x10] sm:$0xf] %vm1838, %v1821
  %1844 = vst.msk [vmem:[%s3 + $0x14] sm:$0xf] %vm1838, %v1822
  %1845 = vst.msk [vmem:[%s3 + $0x18] sm:$0xf] %vm1838, %v1823
  %1846 = vst.msk [vmem:[%s3 + $0x1c] sm:$0xf] %vm1838, %v1824
  %1847 = vst.msk [vmem:[%s3 + $0x20] sm:$0xf] %vm1838, %v1825
  %1848 = vst.msk [vmem:[%s3 + $0x24] sm:$0xf] %vm1838, %v1826
  %1849 = vst.msk [vmem:[%s3 + $0x28] sm:$0xf] %vm1838, %v1827
  %1850 = vst.msk [vmem:[%s3 + $0x2c] sm:$0xf] %vm1838, %v1828
  %1851 = vst.msk [vmem:[%s3 + $0x30] sm:$0xf] %vm1838, %v1829
  %1852 = vst.msk [vmem:[%s3 + $0x34] sm:$0xf] %vm1838, %v1830
  %1853 = vst.msk [vmem:[%s3 + $0x38] sm:$0xf] %vm1838, %v1831
  %1854 = vst.msk [vmem:[%s3 + $0x3c] sm:$0xf] %vm1838, %v1832
  %1855 = vst.msk [vmem:[%s3 + $0x40] sm:$0xf] %vm1838, %v1833
  %1856 = vst.msk [vmem:[%s3 + $0x44] sm:$0xf] %vm1838, %v1834
  %1857 = vst.msk [vmem:[%s3 + $0x48] sm:$0xf] %vm1838, %v1835
  %1858 = vst.msk [vmem:[%s3 + $0x4c] sm:$0xf] %vm1838, %v1836
  %1859 = vst.msk [vmem:[%s3 + $0x50] sm:$0xf] %vm1838, %v1837
  // Predicated region
  $region14: #{tpu_custom_call.1} parent=0 // pred_check
    _
  $region15: #{tpu_custom_call.1} parent=0 // pred_check_branch
    %1861 = sbr.rel (0) target = $region17
  $region16: #{tpu_custom_call.1} parent=0 // pred_region
    _
  $region17: #{tpu_custom_call.1} parent=0 // pred_fallthru
    _
  // Predicated region
  $region18: #{tpu_custom_call.1} parent=0 // pred_check
    _
  $region19: #{tpu_custom_call.1} parent=0 // pred_check_branch
    %1863 = sbr.rel (0) target = $region21
  $region20: #{tpu_custom_call.1} parent=0 // pred_region
    _
  $region21: #{tpu_custom_call.1} parent=0 // pred_fallthru
    _

</llo_original>
